<compile_context>
chip_gen: v7x
topology: tpu7x:2x2x1
jax: 0.10.0
libtpu: 0.0.40
codegen_flags: <defaults>
</compile_context>

<pallas_src>
import math

import jax
import jax.numpy as jnp
from jax import lax
from jax.experimental import pallas as pl
from jax.experimental.pallas import tpu as pltpu

# Pin the plain-JAX reference's matmul precision to match the kernel's explicit
# per-dot HIGHEST precision (the kernel itself does NOT rely on this config).
jax.config.update("jax_default_matmul_precision", "highest")

# ----------------------------- module config --------------------------------
INPUT_DIMS = (16,)                 # input_dims (single component: the only shape-valid config)
NUM_COMPONENTS = len(INPUT_DIMS)   # N
C_TOTAL = sum(INPUT_DIMS)          # C = sum(input_dims)
HIDDEN = 32                        # hidden_dim
BATCH = 2
SEQ = 8
M_ROWS = BATCH * SEQ

# Packed-parameter slab layout (one lane-dense array -> one HBM->VMEM DMA).
BIAS_ROW = ((max(C_TOTAL, HIDDEN) + 7) // 8) * 8   # sublane-aligned bias row (= 32)
SLAB_ROWS = BIAS_ROW + 1                           # 33
SLAB_COLS = C_TOTAL + HIDDEN + NUM_COMPONENTS      # 49 (within a single 128-lane tile)
_COMPONENT_OFFSETS = tuple(int(sum(INPUT_DIMS[:i])) for i in range(NUM_COMPONENTS))


# ------------------------------ exact GELU -----------------------------------
def _erf(x):
    # Abramowitz & Stegun 7.1.26, |err| < 1.5e-7 (matches torch.nn.GELU()'s erf GELU
    # well inside the check tolerance).  exp -> EUP; reciprocal -> EUP (approx).
    p = 0.3275911
    a1, a2, a3, a4, a5 = (0.254829592, -0.284496736, 1.421413741,
                          -1.453152027, 1.061405429)
    s = jnp.where(x >= 0.0, 1.0, -1.0)
    z = jnp.abs(x)
    t = pl.reciprocal(1.0 + p * z, approx=True)
    poly = ((((a5 * t + a4) * t + a3) * t + a2) * t + a1) * t
    return s * (1.0 - poly * jnp.exp(-z * z))


def _gelu_exact(x):
    return 0.5 * x * (1.0 + _erf(x * 0.7071067811865476))


# ------------------------------ Pallas kernel --------------------------------
def _cc_kernel(x_ref, p_ref, out_ref, logits_ref):
    f32 = jnp.float32
    hp = lax.Precision.HIGHEST

    def dot(a, b):  # explicit per-dot precision (review item)
        return jnp.dot(a, b, preferred_element_type=f32, precision=hp)

    x = x_ref[...]                                              # [M, C]

    # Static sub-views of the single packed parameter slab (weights stored [in, out]).
    w_res = p_ref[0:C_TOTAL, 0:C_TOTAL]                         # [C, C]
    w_fc1 = p_ref[0:C_TOTAL, C_TOTAL:C_TOTAL + HIDDEN]          # [C, H]
    w_fc2 = p_ref[0:HIDDEN, C_TOTAL + HIDDEN:SLAB_COLS]         # [H, N]
    biases = p_ref[BIAS_ROW:BIAS_ROW + 1, :]                    # [1, C+H+N]
    b_res = biases[:, 0:C_TOTAL]
    b_fc1 = biases[:, C_TOTAL:C_TOTAL + HIDDEN]
    b_fc2 = biases[:, C_TOTAL + HIDDEN:SLAB_COLS]

    # residual = residual_fc(concatenated)
    residual = dot(x, w_res) + b_res                            # [M, C]

    # gating MLP: fc1 -> exact GELU -> (dropout: eval identity) -> fc2 -> softmax
    h = _gelu_exact(dot(x, w_fc1) + b_fc1)                      # [M, H]
    logits = dot(h, w_fc2) + b_fc2                              # [M, N]
    logits_ref[...] = logits   # auxiliary output, used only by the correctness check
    z = logits - jnp.max(logits, axis=-1, keepdims=True)
    e = jnp.exp(z)
    gates = e / jnp.sum(e, axis=-1, keepdims=True)              # [M, N]

    # Weighted recombination of the components (static lane blocks of the concat input).
    off0, d0 = _COMPONENT_OFFSETS[0], INPUT_DIMS[0]
    combined = gates[:, 0:1] * x[:, off0:off0 + d0]
    for i in range(1, NUM_COMPONENTS):
        off, d = _COMPONENT_OFFSETS[i], INPUT_DIMS[i]
        combined = combined + gates[:, i:i + 1] * x[:, off:off + d]

    # combined_output += residual  (DropPath/BatchNorm do not reach the output)
    out_ref[...] = combined + residual


# ------------------------- parameters (deterministic) ------------------------
def init_params(key):
    def xavier(k, shape):   # (fan_out, fan_in) -- torch.nn.Linear layout
        fan_out, fan_in = shape
        bound = math.sqrt(6.0 / (fan_in + fan_out))
        return jax.random.uniform(k, shape, jnp.float32, -bound, bound)

    def small(k, shape):
        # initialize_weights() zeroes Linear biases; small random values are used
        # here so every bias path in the kernel is actually exercised by the check.
        return 0.05 * jax.random.normal(k, shape, jnp.float32)

    ks = jax.random.split(key, 6)
    return dict(
        residual_w=xavier(ks[0], (C_TOTAL, C_TOTAL)),
        residual_b=small(ks[1], (C_TOTAL,)),
        fc1_w=xavier(ks[2], (HIDDEN, C_TOTAL)),
        fc1_b=small(ks[3], (HIDDEN,)),
        fc2_w=xavier(ks[4], (NUM_COMPONENTS, HIDDEN)),
        fc2_b=small(ks[5], (NUM_COMPONENTS,)),
    )


def pack_params(p):
    """One-time packing of all weights/biases into a single lane-dense slab."""
    slab = jnp.zeros((SLAB_ROWS, SLAB_COLS), jnp.float32)
    slab = slab.at[0:C_TOTAL, 0:C_TOTAL].set(p['residual_w'].T)
    slab = slab.at[0:C_TOTAL, C_TOTAL:C_TOTAL + HIDDEN].set(p['fc1_w'].T)
    slab = slab.at[0:HIDDEN, C_TOTAL + HIDDEN:SLAB_COLS].set(p['fc2_w'].T)
    slab = slab.at[BIAS_ROW, 0:C_TOTAL].set(p['residual_b'])
    slab = slab.at[BIAS_ROW, C_TOTAL:C_TOTAL + HIDDEN].set(p['fc1_b'])
    slab = slab.at[BIAS_ROW, C_TOTAL + HIDDEN:SLAB_COLS].set(p['fc2_b'])
    return slab


# ------------------------------- forward -------------------------------------
def _cost_estimate(m):
    flops = (2 * m * C_TOTAL * C_TOTAL + 2 * m * C_TOTAL * HIDDEN
             + 2 * m * HIDDEN * NUM_COMPONENTS
             + 12 * m * (C_TOTAL + HIDDEN + NUM_COMPONENTS))
    transcendentals = m * HIDDEN + m * NUM_COMPONENTS        # erf exp + softmax exp
    bytes_accessed = 4 * (m * C_TOTAL + SLAB_ROWS * SLAB_COLS
                          + m * C_TOTAL + m * NUM_COMPONENTS)
    return pl.CostEstimate(flops=flops, transcendentals=transcendentals,
                           bytes_accessed=bytes_accessed)


@jax.jit
def component_combination_forward(component_outputs, params_slab):
    # Shape validation (mirrors the module; shapes are static under jit).
    for i, (out, dim) in enumerate(zip(component_outputs, INPUT_DIMS)):
        if out.shape[-1] != dim:
            raise ValueError(f"Component {i} dimension mismatch: expected {dim}, "
                             f"got {out.shape[-1]}")
    # torch.cat(..., -1); also coalesces the N component inputs into ONE lane-dense
    # activation slab -> one HBM->VMEM DMA.
    concat = jnp.concatenate(component_outputs, axis=-1)        # [B, S, C]
    b, s, c = concat.shape
    x2d = concat.reshape(b * s, c)

    vmem = pl.BlockSpec(memory_space=pltpu.MemorySpace.VMEM)
    out2d, logits2d = pl.pallas_call(
        _cc_kernel,
        out_shape=(jax.ShapeDtypeStruct((b * s, c), jnp.float32),
                   jax.ShapeDtypeStruct((b * s, NUM_COMPONENTS), jnp.float32)),
        in_specs=[vmem, vmem],
        out_specs=(vmem, vmem),
        cost_estimate=_cost_estimate(b * s),
    )(x2d, params_slab)
    return out2d.reshape(b, s, c), logits2d.reshape(b, s, NUM_COMPONENTS)


# --------------------------- plain-JAX reference -----------------------------
def component_combination_reference(component_outputs, p):
    concat = jnp.concatenate(component_outputs, axis=-1)
    # self.norm (BatchNorm1d, eval running stats): computed by the original forward
    # but immediately overwritten by `x = self.fc1(concatenated)` -> never reaches
    # the output.  Shown here and discarded for fidelity.
    _ = concat / jnp.sqrt(1.0 + 1e-5)
    residual = concat @ p['residual_w'].T + p['residual_b']
    h = jax.nn.gelu(concat @ p['fc1_w'].T + p['fc1_b'], approximate=False)
    # dropout(p=0.1): identity in eval mode
    logits = h @ p['fc2_w'].T + p['fc2_b']
    gates = jax.nn.softmax(logits, axis=-1)
    combined = gates[..., 0:1] * component_outputs[0]
    for i in range(1, NUM_COMPONENTS):
        combined = combined + gates[..., i:i + 1] * component_outputs[i]
    return combined + residual, logits


if __name__ == "__main__":
    key = jax.random.PRNGKey(0)
    keys = jax.random.split(key, NUM_COMPONENTS + 1)
    k_p, k_comp = keys[0], keys[1:]
    component_outputs = [jax.random.normal(k, (BATCH, SEQ, d), jnp.float32)
                         for k, d in zip(k_comp, INPUT_DIMS)]
    params = init_params(k_p)
    params_slab = pack_params(params)        # one-time packing (hoisted out of the call)

    out, logits = component_combination_forward(component_outputs, params_slab)
    out = jax.block_until_ready(out)

    ref_out, ref_logits = component_combination_reference(component_outputs, params)
    err = float(jnp.max(jnp.abs(out - ref_out)))
    err_logits = float(jnp.max(jnp.abs(logits - ref_logits)))
    assert out.shape == (BATCH, SEQ, C_TOTAL), out.shape
    assert err < 2e-3, f"combined-output max abs err {err}"
    assert err_logits < 2e-3, f"gating-logits max abs err {err_logits}"
    print("KERNEL_OK")
</pallas_src>

<mosaic_0001>
module attributes {stable_mosaic.version = 11 : i64} {
  func.func @_cc_kernel(%arg0: memref<16x16xf32, #tpu.memory_space<vmem>>, %arg1: memref<33x49xf32, #tpu.memory_space<vmem>>, %arg2: memref<16x16xf32, #tpu.memory_space<vmem>>, %arg3: memref<16x1xf32, #tpu.memory_space<vmem>>) attributes {dimension_semantics = [], scalar_prefetch = 0 : i64, scratch_operands = 0 : i64, tpu.core_type = #tpu.core_type<tc>} {
    %c0 = arith.constant 0 : index
    %c0_0 = arith.constant 0 : index
    %0 = vector.load %arg0[%c0, %c0_0] : memref<16x16xf32, #tpu.memory_space<vmem>>, vector<16x16xf32>
    %c0_1 = arith.constant 0 : index
    %c0_2 = arith.constant 0 : index
    %1 = vector.load %arg1[%c0_1, %c0_2] : memref<33x49xf32, #tpu.memory_space<vmem>>, vector<16x16xf32>
    %c0_3 = arith.constant 0 : index
    %c16 = arith.constant 16 : index
    %2 = vector.load %arg1[%c0_3, %c16] : memref<33x49xf32, #tpu.memory_space<vmem>>, vector<16x32xf32>
    %c0_4 = arith.constant 0 : index
    %c48 = arith.constant 48 : index
    %3 = vector.load %arg1[%c0_4, %c48] : memref<33x49xf32, #tpu.memory_space<vmem>>, vector<32x1xf32>
    %c32 = arith.constant 32 : index
    %c0_5 = arith.constant 0 : index
    %4 = vector.load %arg1[%c32, %c0_5] : memref<33x49xf32, #tpu.memory_space<vmem>>, vector<1x49xf32>
    %5 = vector.extract_strided_slice %4 {offsets = [0, 0], sizes = [1, 16], strides = [1, 1]} : vector<1x49xf32> to vector<1x16xf32>
    %6 = vector.extract_strided_slice %4 {offsets = [0, 16], sizes = [1, 32], strides = [1, 1]} : vector<1x49xf32> to vector<1x32xf32>
    %7 = vector.extract_strided_slice %4 {offsets = [0, 48], sizes = [1, 1], strides = [1, 1]} : vector<1x49xf32> to vector<1x1xf32>
    %cst = arith.constant dense<0.000000e+00> : vector<16x16xf32>
    %8 = tpu.matmul %0, %1, %cst {dimension_numbers = #tpu.dot_dimension_numbers<[1], [0], [0], [1], [0, 0, 1, 1], [], []>, precision = #tpu.contract_precision<fp32>} : vector<16x16xf32>, vector<16x16xf32>, vector<16x16xf32> -> vector<16x16xf32>
    %9 = vector.broadcast %5 : vector<1x16xf32> to vector<16x16xf32>
    %10 = arith.addf %8, %9 : vector<16x16xf32>
    %cst_6 = arith.constant dense<0.000000e+00> : vector<16x32xf32>
    %11 = tpu.matmul %0, %2, %cst_6 {dimension_numbers = #tpu.dot_dimension_numbers<[1], [0], [0], [1], [0, 0, 1, 1], [], []>, precision = #tpu.contract_precision<fp32>} : vector<16x16xf32>, vector<16x32xf32>, vector<16x32xf32> -> vector<16x32xf32>
    %12 = vector.broadcast %6 : vector<1x32xf32> to vector<16x32xf32>
    %13 = arith.addf %11, %12 : vector<16x32xf32>
    %cst_7 = arith.constant 5.000000e-01 : f32
    %14 = vector.broadcast %cst_7 : f32 to vector<16x32xf32>
    %15 = arith.mulf %14, %13 : vector<16x32xf32>
    %cst_8 = arith.constant 0.707106769 : f32
    %16 = vector.broadcast %cst_8 : f32 to vector<16x32xf32>
    %17 = arith.mulf %13, %16 : vector<16x32xf32>
    %cst_9 = arith.constant 0.000000e+00 : f32
    %18 = vector.broadcast %cst_9 : f32 to vector<16x32xf32>
    %19 = arith.cmpf oge, %17, %18 : vector<16x32xf32>
    %cst_10 = arith.constant 1.000000e+00 : f32
    %cst_11 = arith.constant -1.000000e+00 : f32
    %20 = vector.broadcast %cst_10 : f32 to vector<16x32xf32>
    %21 = vector.broadcast %cst_11 : f32 to vector<16x32xf32>
    %22 = arith.select %19, %20, %21 : vector<16x32xi1>, vector<16x32xf32>
    %23 = math.absf %17 : vector<16x32xf32>
    %cst_12 = arith.constant 0.327591091 : f32
    %24 = vector.broadcast %cst_12 : f32 to vector<16x32xf32>
    %25 = arith.mulf %24, %23 : vector<16x32xf32>
    %cst_13 = arith.constant 1.000000e+00 : f32
    %26 = vector.broadcast %cst_13 : f32 to vector<16x32xf32>
    %27 = arith.addf %26, %25 : vector<16x32xf32>
    %28 = tpu.reciprocal %27 {approx = true} : vector<16x32xf32> -> vector<16x32xf32>
    %cst_14 = arith.constant 1.06140542 : f32
    %29 = vector.broadcast %cst_14 : f32 to vector<16x32xf32>
    %30 = arith.mulf %29, %28 : vector<16x32xf32>
    %cst_15 = arith.constant -1.45315206 : f32
    %31 = vector.broadcast %cst_15 : f32 to vector<16x32xf32>
    %32 = arith.addf %30, %31 : vector<16x32xf32>
    %33 = arith.mulf %32, %28 : vector<16x32xf32>
    %cst_16 = arith.constant 1.42141378 : f32
    %34 = vector.broadcast %cst_16 : f32 to vector<16x32xf32>
    %35 = arith.addf %33, %34 : vector<16x32xf32>
    %36 = arith.mulf %35, %28 : vector<16x32xf32>
    %cst_17 = arith.constant -0.284496725 : f32
    %37 = vector.broadcast %cst_17 : f32 to vector<16x32xf32>
    %38 = arith.addf %36, %37 : vector<16x32xf32>
    %39 = arith.mulf %38, %28 : vector<16x32xf32>
    %cst_18 = arith.constant 0.254829586 : f32
    %40 = vector.broadcast %cst_18 : f32 to vector<16x32xf32>
    %41 = arith.addf %39, %40 : vector<16x32xf32>
    %42 = arith.mulf %41, %28 : vector<16x32xf32>
    %cst_19 = arith.constant 0.000000e+00 : f32
    %43 = vector.broadcast %cst_19 : f32 to vector<16x32xf32>
    %44 = arith.subf %43, %23 : vector<16x32xf32>
    %45 = arith.mulf %44, %23 : vector<16x32xf32>
    %46 = math.exp %45 : vector<16x32xf32>
    %47 = arith.mulf %42, %46 : vector<16x32xf32>
    %cst_20 = arith.constant 1.000000e+00 : f32
    %48 = vector.broadcast %cst_20 : f32 to vector<16x32xf32>
    %49 = arith.subf %48, %47 : vector<16x32xf32>
    %50 = arith.mulf %22, %49 : vector<16x32xf32>
    %cst_21 = arith.constant 1.000000e+00 : f32
    %51 = vector.broadcast %cst_21 : f32 to vector<16x32xf32>
    %52 = arith.addf %51, %50 : vector<16x32xf32>
    %53 = arith.mulf %15, %52 : vector<16x32xf32>
    %cst_22 = arith.constant dense<0.000000e+00> : vector<16x1xf32>
    %54 = tpu.matmul %53, %3, %cst_22 {dimension_numbers = #tpu.dot_dimension_numbers<[1], [0], [0], [1], [0, 0, 1, 1], [], []>, precision = #tpu.contract_precision<fp32>} : vector<16x32xf32>, vector<32x1xf32>, vector<16x1xf32> -> vector<16x1xf32>
    %55 = vector.broadcast %7 : vector<1x1xf32> to vector<16x1xf32>
    %56 = arith.addf %54, %55 : vector<16x1xf32>
    %c0_23 = arith.constant 0 : index
    %c0_24 = arith.constant 0 : index
    %57 = vector.load %arg3[%c0_23, %c0_24] : memref<16x1xf32, #tpu.memory_space<vmem>>, vector<16x1xf32>
    tpu.vector_store %arg3[%c0_23, %c0_24], %56 {strides = array<i32>} : memref<16x1xf32, #tpu.memory_space<vmem>>, vector<16x1xf32>,
    %cst_25 = arith.constant dense<0xFF800000> : vector<16xf32>
    %58 = vector.multi_reduction <maximumf>, %56, %cst_25 [1] : vector<16x1xf32> to vector<16xf32>
    %59 = vector.shape_cast %58 : vector<16xf32> to vector<16x1xf32>
    %60 = arith.subf %56, %59 : vector<16x1xf32>
    %61 = math.exp %60 : vector<16x1xf32>
    %cst_26 = arith.constant dense<0.000000e+00> : vector<16xf32>
    %62 = vector.multi_reduction <add>, %61, %cst_26 [1] : vector<16x1xf32> to vector<16xf32>
    %63 = vector.shape_cast %62 : vector<16xf32> to vector<16x1xf32>
    %64 = arith.divf %61, %63 : vector<16x1xf32>
    %65 = vector.broadcast %64 : vector<16x1xf32> to vector<16x16xf32>
    %66 = arith.mulf %65, %0 : vector<16x16xf32>
    %67 = arith.addf %66, %10 : vector<16x16xf32>
    %c0_27 = arith.constant 0 : index
    %c0_28 = arith.constant 0 : index
    %68 = vector.load %arg2[%c0_27, %c0_28] : memref<16x16xf32, #tpu.memory_space<vmem>>, vector<16x16xf32>
    tpu.vector_store %arg2[%c0_27, %c0_28], %67 {strides = array<i32>} : memref<16x16xf32, #tpu.memory_space<vmem>>, vector<16x16xf32>,
    return
  }
}

</mosaic_0001>

<llo_original>
// kernel: component_combination_forward.1
$region0: #{component_combination_forward.1}
  #allocation0 [shape = 'u32[]', space=smem, size = 0x4, offset = 0x4, fixed_abs, tag = 'smem constant byte address 0x4 - core index']
  #allocation1 [shape = 'u32[144,128]{1,0:T(1,128)}', space=vmem, size = 0x12000, scoped, tag = 'internal scratch']
  %s0 = inlined_call_operand.hbm [shape: f32[16,16], index: 0, kind: input, shape index: {}]
  %s1 = inlined_call_operand.hbm [shape: f32[33,49], index: 1, kind: input, shape index: {}]
  %s2 = inlined_call_operand.hbm [shape: f32[16,16], index: 2, kind: output, shape index: {0}]
  %s3 = inlined_call_operand.vmem [shape: f32[16,1], index: 3, kind: output, shape index: {1}]
  %4 = xla_tuple %s2, %s3
  %s5 = sld [smem:[#allocation0]]
  $region34: #{component_combination_forward.1} parent=0
    _
  %s7 = ssub.s32 1, %s5
  %s8 = scalar_select 0, %s7, %s5
  $region1: #{component_combination_forward.1} parent=0
    #allocation2 [shape = 'u8[8192]{0}', space=vmem, size = 0x2000, scoped, tag = 'input window, operand 0, single buffered']
    #allocation3 [shape = 's32[1]{0}', space=sflag, size = 0x4, scoped, tag = 'scoped memory for component_combination_forward.1']
    #allocation4 [shape = 's32[1]{0}', space=sflag, size = 0x4, scoped, tag = 'scoped memory for component_combination_forward.1']
    #allocation5 [shape = 'u8[20480]{0}', space=vmem, size = 0x5000, scoped, tag = 'input window, operand 1, single buffered']
    #allocation6 [shape = 's32[1]{0}', space=sflag, size = 0x4, scoped, tag = 'scoped memory for component_combination_forward.1']
    #allocation7 [shape = 'u8[8192]{0}', space=vmem, size = 0x2000, scoped, tag = 'output window, operand 0, single buffered']
    %9 = vsyncpa [#allocation3], 0
    %10 = vsyncpa [#allocation6], 0
    %11 = vsyncpa [#allocation4], 0
    // Predicated region
    $region2: #{component_combination_forward.1} parent=1 // pred_check
      _
    $region3: #{component_combination_forward.1} parent=1 // pred_check_branch
      %13 = sbr.rel (0) target = $region5
    $region4: #{component_combination_forward.1} parent=1 // pred_region
      %s15 = ssub.s32 256, 256
      %16 = vsyncadd [#allocation3], %s15
      %s17 = sshll.u32 [#allocation2], 4
      %s18 = int_to_ptr.vmem [resolvable:$true] %s17
      %23 = dma.hbm_to_vmem [thread:$0]  %s0, 256, %s18, [#allocation3], 128, 128, 8
    $region5: #{component_combination_forward.1} parent=1 // pred_fallthru
      _
    // Predicated region
    $region6: #{component_combination_forward.1} parent=1 // pred_check
      _
    $region7: #{component_combination_forward.1} parent=1 // pred_check_branch
      %25 = sbr.rel (0) target = $region9
    $region8: #{component_combination_forward.1} parent=1 // pred_region
      %s27 = ssub.s32 640, 640
      %28 = vsyncadd [#allocation6], %s27
      %s29 = sshll.u32 [#allocation5], 4
      %s30 = int_to_ptr.vmem [resolvable:$true] %s29
      %35 = dma.hbm_to_vmem [thread:$0]  %s1, 640, %s30, [#allocation6], 128, 128, 8
    $region9: #{component_combination_forward.1} parent=1 // pred_fallthru
      _
    // Predicated region
    $region10: #{component_combination_forward.1} parent=1 // pred_check
      _
    $region11: #{component_combination_forward.1} parent=1 // pred_check_branch
      %37 = sbr.rel (0) target = $region13
    $region12: #{component_combination_forward.1} parent=1 // pred_region
      %38 = dma.done [#allocation3], 256
    $region13: #{component_combination_forward.1} parent=1 // pred_fallthru
      _
    // Predicated region
    $region14: #{component_combination_forward.1} parent=1 // pred_check
      _
    $region15: #{component_combination_forward.1} parent=1 // pred_check_branch
      %40 = sbr.rel (0) target = $region17
    $region16: #{component_combination_forward.1} parent=1 // pred_region
      %41 = dma.done [#allocation6], 640
    $region17: #{component_combination_forward.1} parent=1 // pred_fallthru
      _
    %v42 = vld [vmem:[#allocation2] sm:$0xff]
    %v43 = vld [vmem:[#allocation2 + $0x8] sm:$0xff]
    %v44 = vld [vmem:[#allocation5] sm:$0xff]
    %v45 = vld [vmem:[#allocation5 + $0x8] sm:$0xff]
    %v46 = vld [vmem:[#allocation5 + $0x10] sm:$0xff]
    %v47 = vld [vmem:[#allocation5 + $0x18] sm:$0xff]
    %v48 = vld [vmem:[#allocation5 + $0x20] sm:$0x1]
    %v49 = vlaneseq
    %v50 = vshrl.u32 %v49, 7
    %v51 = vsub.s32 0, %v50
    %v52 = vrot.slane %v48, %v51
    %vm53 = vcmask 130048
    %v55 = vsel %vm53, %v42, 0
    %v58 = vsel %vm53, %v43, 0
    %60 = vmatprep.subr.mxu0 0.0
    %v61 = vand.u32 %v44, 4294901760
    %62 = vmatpush1.msra.mxu0 %v61
    %63 = vmatprep.subr.mxu0 0.0
    %v64 = vand.u32 %v45, 4294901760
    %65 = vmatpush1.msra.mxu0 %v64
    %66 = vmatprep.subr.mxu0 0.0
    %67 = vmatpush1.msra.mxu0 0.0
    %68 = vmatprep.subr.mxu0 0.0
    %69 = vmatpush1.msra.mxu0 0.0
    %70 = vmatprep.subr.mxu0 0.0
    %71 = vmatpush1.msra.mxu0 0.0
    %72 = vmatprep.subr.mxu0 0.0
    %73 = vmatpush1.msra.mxu0 0.0
    %74 = vmatprep.subr.mxu0 0.0
    %75 = vmatpush1.msra.mxu0 0.0
    %76 = vmatprep.subr.mxu0 0.0
    %77 = vmatpush1.msra.mxu0 0.0
    %78 = vmatprep.subr.mxu0 0.0
    %79 = vmatpush1.msra.mxu0 0.0
    %80 = vmatprep.subr.mxu0 0.0
    %81 = vmatpush1.msra.mxu0 0.0
    %82 = vmatprep.subr.mxu0 0.0
    %83 = vmatpush1.msra.mxu0 0.0
    %84 = vmatprep.subr.mxu0 0.0
    %85 = vmatpush1.msra.mxu0 0.0
    %86 = vmatprep.subr.mxu0 0.0
    %87 = vmatpush1.msra.mxu0 0.0
    %88 = vmatprep.subr.mxu0 0.0
    %89 = vmatpush1.msra.mxu0 0.0
    %90 = vmatprep.subr.mxu0 0.0
    %91 = vmatpush1.msra.mxu0 0.0
    %92 = vmatprep.subr.mxu0 0.0
    %93 = vmatpush1.msra.mxu0 0.0
    %94 = vmatprep.subr.mxu0 0.0
    %95 = vmatpush1.msra.mxu0 0.0
    %96 = vmatprep.subr.mxu0 0.0
    %97 = vmatpush1.msra.mxu0 0.0
    %98 = vmatprep.subr.mxu0 0.0
    %99 = vmatpush1.msra.mxu0 0.0
    %100 = vmatprep.subr.mxu0 0.0
    %101 = vmatpush1.msra.mxu0 0.0
    %102 = vmatprep.subr.mxu0 0.0
    %103 = vmatpush1.msra.mxu0 0.0
    %104 = vmatprep.subr.mxu0 0.0
    %105 = vmatpush1.msra.mxu0 0.0
    %106 = vmatprep.subr.mxu0 0.0
    %107 = vmatpush1.msra.mxu0 0.0
    %108 = vmatprep.subr.mxu0 0.0
    %109 = vmatpush1.msra.mxu0 0.0
    %110 = vmatprep.subr.mxu0 0.0
    %111 = vmatpush1.msra.mxu0 0.0
    %112 = vmatprep.subr.mxu0 0.0
    %113 = vmatpush1.msra.mxu0 0.0
    %114 = vmatprep.subr.mxu0 0.0
    %115 = vmatpush1.msra.mxu0 0.0
    %116 = vmatprep.subr.mxu0 0.0
    %117 = vmatpush1.msra.mxu0 0.0
    %118 = vmatprep.subr.mxu0 0.0
    %119 = vmatpush1.msra.mxu0 0.0
    %120 = vmatprep.subr.mxu0 0.0
    %121 = vmatpush1.msra.mxu0 0.0
    %122 = vmatprep.subr.mxu0 0.0
    %123 = vmatpush1.msra.mxu0 0.0
    %124 = vmatprep.subr.mxu0 0.0
    %125 = vmatpush1.msra.mxu0 0.0
    %126 = vmatprep.mubr.f32.mxu0 0.0
    %v127 = vand.u32 %v55, 4294901760
    %v128 = vsub.f32 %v55, %v127
    %v129 = vand.u32 %v128, 4294901760
    %v130 = vsub.f32 %v128, %v129
    %v131 = vand.u32 %v130, 4294901760
    %132 = vmatmul.mubr.f32.gmra.mrb[0].mxu0 %v131
    %v133 = vpop.f32.mrb[0].mxu0
    %v134 = vadd.f32 %v52, %v133
    %v135 = vpop.f32.mrb[0].mxu0
    %136 = vmatprep.mubr.f32.mxu0 0.0
    %v137 = vand.u32 %v58, 4294901760
    %v138 = vsub.f32 %v58, %v137
    %v139 = vand.u32 %v138, 4294901760
    %v140 = vsub.f32 %v138, %v139
    %v141 = vand.u32 %v140, 4294901760
    %142 = vmatmul.mubr.f32.gmra.mrb[0].mxu0 %v141
    %v143 = vpop.f32.mrb[0].mxu0
    %v144 = vadd.f32 %v52, %v143
    %v145 = vpop.f32.mrb[0].mxu0
    %146 = vdwg.mxu0
    %147 = vmatprep.subr.mxu0 0.0
    %v148 = vand.u32 %v44, 4294901760
    %v149 = vsub.f32 %v44, %v148
    %v150 = vand.u32 %v149, 4294901760
    %v151 = vsub.f32 %v149, %v150
    %v152 = vand.u32 %v151, 4294901760
    %153 = vmatpush1.msra.mxu0 %v152
    %154 = vmatprep.subr.mxu0 0.0
    %v155 = vand.u32 %v45, 4294901760
    %v156 = vsub.f32 %v45, %v155
    %v157 = vand.u32 %v156, 4294901760
    %v158 = vsub.f32 %v156, %v157
    %v159 = vand.u32 %v158, 4294901760
    %160 = vmatpush1.msra.mxu0 %v159
    %161 = vmatprep.subr.mxu0 0.0
    %162 = vmatpush1.msra.mxu0 0.0
    %163 = vmatprep.subr.mxu0 0.0
    %164 = vmatpush1.msra.mxu0 0.0
    %165 = vmatprep.subr.mxu0 0.0
    %166 = vmatpush1.msra.mxu0 0.0
    %167 = vmatprep.subr.mxu0 0.0
    %168 = vmatpush1.msra.mxu0 0.0
    %169 = vmatprep.subr.mxu0 0.0
    %170 = vmatpush1.msra.mxu0 0.0
    %171 = vmatprep.subr.mxu0 0.0
    %172 = vmatpush1.msra.mxu0 0.0
    %173 = vmatprep.subr.mxu0 0.0
    %174 = vmatpush1.msra.mxu0 0.0
    %175 = vmatprep.subr.mxu0 0.0
    %176 = vmatpush1.msra.mxu0 0.0
    %177 = vmatprep.subr.mxu0 0.0
    %178 = vmatpush1.msra.mxu0 0.0
    %179 = vmatprep.subr.mxu0 0.0
    %180 = vmatpush1.msra.mxu0 0.0
    %181 = vmatprep.subr.mxu0 0.0
    %182 = vmatpush1.msra.mxu0 0.0
    %183 = vmatprep.subr.mxu0 0.0
    %184 = vmatpush1.msra.mxu0 0.0
    %185 = vmatprep.subr.mxu0 0.0
    %186 = vmatpush1.msra.mxu0 0.0
    %187 = vmatprep.subr.mxu0 0.0
    %188 = vmatpush1.msra.mxu0 0.0
    %189 = vmatprep.subr.mxu0 0.0
    %190 = vmatpush1.msra.mxu0 0.0
    %191 = vmatprep.subr.mxu0 0.0
    %192 = vmatpush1.msra.mxu0 0.0
    %193 = vmatprep.subr.mxu0 0.0
    %194 = vmatpush1.msra.mxu0 0.0
    %195 = vmatprep.subr.mxu0 0.0
    %196 = vmatpush1.msra.mxu0 0.0
    %197 = vmatprep.subr.mxu0 0.0
    %198 = vmatpush1.msra.mxu0 0.0
    %199 = vmatprep.subr.mxu0 0.0
    %200 = vmatpush1.msra.mxu0 0.0
    %201 = vmatprep.subr.mxu0 0.0
    %202 = vmatpush1.msra.mxu0 0.0
    %203 = vmatprep.subr.mxu0 0.0
    %204 = vmatpush1.msra.mxu0 0.0
    %205 = vmatprep.subr.mxu0 0.0
    %206 = vmatpush1.msra.mxu0 0.0
    %207 = vmatprep.subr.mxu0 0.0
    %208 = vmatpush1.msra.mxu0 0.0
    %209 = vmatprep.subr.mxu0 0.0
    %210 = vmatpush1.msra.mxu0 0.0
    %211 = vmatprep.subr.mxu0 0.0
    %212 = vmatpush1.msra.mxu0 0.0
    %213 = vmatprep.subr.mxu0 0.0
    %214 = vmatpush1.msra.mxu0 0.0
    %215 = vmatprep.subr.mxu0 0.0
    %216 = vmatpush1.msra.mxu0 0.0
    %217 = vmatprep.subr.mxu0 0.0
    %218 = vmatpush1.msra.mxu0 0.0
    %219 = vmatprep.subr.mxu0 0.0
    %220 = vmatpush1.msra.mxu0 0.0
    %221 = vmatprep.mubr.f32.mxu0 0.0
    %v222 = vand.u32 %v55, 4294901760
    %223 = vmatmul.mubr.f32.gmra.mrb[0].mxu0 %v222
    %v224 = vpop.f32.mrb[0].mxu0
    %v225 = vadd.f32 %v134, %v224
    %v226 = vpop.f32.mrb[0].mxu0
    %227 = vmatprep.mubr.f32.mxu0 0.0
    %v228 = vand.u32 %v58, 4294901760
    %229 = vmatmul.mubr.f32.gmra.mrb[0].mxu0 %v228
    %v230 = vpop.f32.mrb[0].mxu0
    %v231 = vadd.f32 %v144, %v230
    %v232 = vpop.f32.mrb[0].mxu0
    %233 = vdwg.mxu0
    %234 = vmatprep.subr.mxu0 0.0
    %v235 = vand.u32 %v44, 4294901760
    %v236 = vsub.f32 %v44, %v235
    %237 = vmatpush1.msra.mxu0 %v236
    %238 = vmatprep.subr.mxu0 0.0
    %v239 = vand.u32 %v45, 4294901760
    %v240 = vsub.f32 %v45, %v239
    %241 = vmatpush1.msra.mxu0 %v240
    %242 = vmatprep.subr.mxu0 0.0
    %243 = vmatpush1.msra.mxu0 0.0
    %244 = vmatprep.subr.mxu0 0.0
    %245 = vmatpush1.msra.mxu0 0.0
    %246 = vmatprep.subr.mxu0 0.0
    %247 = vmatpush1.msra.mxu0 0.0
    %248 = vmatprep.subr.mxu0 0.0
    %249 = vmatpush1.msra.mxu0 0.0
    %250 = vmatprep.subr.mxu0 0.0
    %251 = vmatpush1.msra.mxu0 0.0
    %252 = vmatprep.subr.mxu0 0.0
    %253 = vmatpush1.msra.mxu0 0.0
    %254 = vmatprep.subr.mxu0 0.0
    %255 = vmatpush1.msra.mxu0 0.0
    %256 = vmatprep.subr.mxu0 0.0
    %257 = vmatpush1.msra.mxu0 0.0
    %258 = vmatprep.subr.mxu0 0.0
    %259 = vmatpush1.msra.mxu0 0.0
    %260 = vmatprep.subr.mxu0 0.0
    %261 = vmatpush1.msra.mxu0 0.0
    %262 = vmatprep.subr.mxu0 0.0
    %263 = vmatpush1.msra.mxu0 0.0
    %264 = vmatprep.subr.mxu0 0.0
    %265 = vmatpush1.msra.mxu0 0.0
    %266 = vmatprep.subr.mxu0 0.0
    %267 = vmatpush1.msra.mxu0 0.0
    %268 = vmatprep.subr.mxu0 0.0
    %269 = vmatpush1.msra.mxu0 0.0
    %270 = vmatprep.subr.mxu0 0.0
    %271 = vmatpush1.msra.mxu0 0.0
    %272 = vmatprep.subr.mxu0 0.0
    %273 = vmatpush1.msra.mxu0 0.0
    %274 = vmatprep.subr.mxu0 0.0
    %275 = vmatpush1.msra.mxu0 0.0
    %276 = vmatprep.subr.mxu0 0.0
    %277 = vmatpush1.msra.mxu0 0.0
    %278 = vmatprep.subr.mxu0 0.0
    %279 = vmatpush1.msra.mxu0 0.0
    %280 = vmatprep.subr.mxu0 0.0
    %281 = vmatpush1.msra.mxu0 0.0
    %282 = vmatprep.subr.mxu0 0.0
    %283 = vmatpush1.msra.mxu0 0.0
    %284 = vmatprep.subr.mxu0 0.0
    %285 = vmatpush1.msra.mxu0 0.0
    %286 = vmatprep.subr.mxu0 0.0
    %287 = vmatpush1.msra.mxu0 0.0
    %288 = vmatprep.subr.mxu0 0.0
    %289 = vmatpush1.msra.mxu0 0.0
    %290 = vmatprep.subr.mxu0 0.0
    %291 = vmatpush1.msra.mxu0 0.0
    %292 = vmatprep.subr.mxu0 0.0
    %293 = vmatpush1.msra.mxu0 0.0
    %294 = vmatprep.subr.mxu0 0.0
    %295 = vmatpush1.msra.mxu0 0.0
    %296 = vmatprep.subr.mxu0 0.0
    %297 = vmatpush1.msra.mxu0 0.0
    %298 = vmatprep.subr.mxu0 0.0
    %299 = vmatpush1.msra.mxu0 0.0
    %300 = vmatprep.subr.mxu0 0.0
    %301 = vmatpush1.msra.mxu0 0.0
    %302 = vmatprep.mubr.f32.mxu0 0.0
    %v303 = vand.u32 %v55, 4294901760
    %v304 = vsub.f32 %v55, %v303
    %305 = vmatmul.mubr.f32.gmra.mrb[0].mxu0 %v304
    %v306 = vpop.f32.mrb[0].mxu0
    %v307 = vadd.f32 %v225, %v306
    %v308 = vpop.f32.mrb[0].mxu0
    %309 = vmatprep.mubr.f32.mxu0 0.0
    %v310 = vand.u32 %v58, 4294901760
    %v311 = vsub.f32 %v58, %v310
    %312 = vmatmul.mubr.f32.gmra.mrb[0].mxu0 %v311
    %v313 = vpop.f32.mrb[0].mxu0
    %v314 = vadd.f32 %v231, %v313
    %v315 = vpop.f32.mrb[0].mxu0
    %316 = vdwg.mxu0
    %317 = vmatprep.subr.mxu0 0.0
    %v318 = vand.u32 %v44, 4294901760
    %319 = vmatpush1.msra.mxu0 %v318
    %320 = vmatprep.subr.mxu0 0.0
    %v321 = vand.u32 %v45, 4294901760
    %322 = vmatpush1.msra.mxu0 %v321
    %323 = vmatprep.subr.mxu0 0.0
    %324 = vmatpush1.msra.mxu0 0.0
    %325 = vmatprep.subr.mxu0 0.0
    %326 = vmatpush1.msra.mxu0 0.0
    %327 = vmatprep.subr.mxu0 0.0
    %328 = vmatpush1.msra.mxu0 0.0
    %329 = vmatprep.subr.mxu0 0.0
    %330 = vmatpush1.msra.mxu0 0.0
    %331 = vmatprep.subr.mxu0 0.0
    %332 = vmatpush1.msra.mxu0 0.0
    %333 = vmatprep.subr.mxu0 0.0
    %334 = vmatpush1.msra.mxu0 0.0
    %335 = vmatprep.subr.mxu0 0.0
    %336 = vmatpush1.msra.mxu0 0.0
    %337 = vmatprep.subr.mxu0 0.0
    %338 = vmatpush1.msra.mxu0 0.0
    %339 = vmatprep.subr.mxu0 0.0
    %340 = vmatpush1.msra.mxu0 0.0
    %341 = vmatprep.subr.mxu0 0.0
    %342 = vmatpush1.msra.mxu0 0.0
    %343 = vmatprep.subr.mxu0 0.0
    %344 = vmatpush1.msra.mxu0 0.0
    %345 = vmatprep.subr.mxu0 0.0
    %346 = vmatpush1.msra.mxu0 0.0
    %347 = vmatprep.subr.mxu0 0.0
    %348 = vmatpush1.msra.mxu0 0.0
    %349 = vmatprep.subr.mxu0 0.0
    %350 = vmatpush1.msra.mxu0 0.0
    %351 = vmatprep.subr.mxu0 0.0
    %352 = vmatpush1.msra.mxu0 0.0
    %353 = vmatprep.subr.mxu0 0.0
    %354 = vmatpush1.msra.mxu0 0.0
    %355 = vmatprep.subr.mxu0 0.0
    %356 = vmatpush1.msra.mxu0 0.0
    %357 = vmatprep.subr.mxu0 0.0
    %358 = vmatpush1.msra.mxu0 0.0
    %359 = vmatprep.subr.mxu0 0.0
    %360 = vmatpush1.msra.mxu0 0.0
    %361 = vmatprep.subr.mxu0 0.0
    %362 = vmatpush1.msra.mxu0 0.0
    %363 = vmatprep.subr.mxu0 0.0
    %364 = vmatpush1.msra.mxu0 0.0
    %365 = vmatprep.subr.mxu0 0.0
    %366 = vmatpush1.msra.mxu0 0.0
    %367 = vmatprep.subr.mxu0 0.0
    %368 = vmatpush1.msra.mxu0 0.0
    %369 = vmatprep.subr.mxu0 0.0
    %370 = vmatpush1.msra.mxu0 0.0
    %371 = vmatprep.subr.mxu0 0.0
    %372 = vmatpush1.msra.mxu0 0.0
    %373 = vmatprep.subr.mxu0 0.0
    %374 = vmatpush1.msra.mxu0 0.0
    %375 = vmatprep.subr.mxu0 0.0
    %376 = vmatpush1.msra.mxu0 0.0
    %377 = vmatprep.subr.mxu0 0.0
    %378 = vmatpush1.msra.mxu0 0.0
    %379 = vmatprep.subr.mxu0 0.0
    %380 = vmatpush1.msra.mxu0 0.0
    %381 = vmatprep.subr.mxu0 0.0
    %382 = vmatpush1.msra.mxu0 0.0
    %383 = vmatprep.mubr.f32.mxu0 0.0
    %v384 = vand.u32 %v55, 4294901760
    %v385 = vsub.f32 %v55, %v384
    %v386 = vand.u32 %v385, 4294901760
    %387 = vmatmul.mubr.f32.gmra.mrb[0].mxu0 %v386
    %v388 = vpop.f32.mrb[0].mxu0
    %v389 = vadd.f32 %v307, %v388
    %v390 = vpop.f32.mrb[0].mxu0
    %391 = vmatprep.mubr.f32.mxu0 0.0
    %v392 = vand.u32 %v58, 4294901760
    %v393 = vsub.f32 %v58, %v392
    %v394 = vand.u32 %v393, 4294901760
    %395 = vmatmul.mubr.f32.gmra.mrb[0].mxu0 %v394
    %v396 = vpop.f32.mrb[0].mxu0
    %v397 = vadd.f32 %v314, %v396
    %v398 = vpop.f32.mrb[0].mxu0
    %399 = vdwg.mxu0
    %400 = vmatprep.subr.mxu0 0.0
    %v401 = vand.u32 %v44, 4294901760
    %v402 = vsub.f32 %v44, %v401
    %v403 = vand.u32 %v402, 4294901760
    %404 = vmatpush1.msra.mxu0 %v403
    %405 = vmatprep.subr.mxu0 0.0
    %v406 = vand.u32 %v45, 4294901760
    %v407 = vsub.f32 %v45, %v406
    %v408 = vand.u32 %v407, 4294901760
    %409 = vmatpush1.msra.mxu0 %v408
    %410 = vmatprep.subr.mxu0 0.0
    %411 = vmatpush1.msra.mxu0 0.0
    %412 = vmatprep.subr.mxu0 0.0
    %413 = vmatpush1.msra.mxu0 0.0
    %414 = vmatprep.subr.mxu0 0.0
    %415 = vmatpush1.msra.mxu0 0.0
    %416 = vmatprep.subr.mxu0 0.0
    %417 = vmatpush1.msra.mxu0 0.0
    %418 = vmatprep.subr.mxu0 0.0
    %419 = vmatpush1.msra.mxu0 0.0
    %420 = vmatprep.subr.mxu0 0.0
    %421 = vmatpush1.msra.mxu0 0.0
    %422 = vmatprep.subr.mxu0 0.0
    %423 = vmatpush1.msra.mxu0 0.0
    %424 = vmatprep.subr.mxu0 0.0
    %425 = vmatpush1.msra.mxu0 0.0
    %426 = vmatprep.subr.mxu0 0.0
    %427 = vmatpush1.msra.mxu0 0.0
    %428 = vmatprep.subr.mxu0 0.0
    %429 = vmatpush1.msra.mxu0 0.0
    %430 = vmatprep.subr.mxu0 0.0
    %431 = vmatpush1.msra.mxu0 0.0
    %432 = vmatprep.subr.mxu0 0.0
    %433 = vmatpush1.msra.mxu0 0.0
    %434 = vmatprep.subr.mxu0 0.0
    %435 = vmatpush1.msra.mxu0 0.0
    %436 = vmatprep.subr.mxu0 0.0
    %437 = vmatpush1.msra.mxu0 0.0
    %438 = vmatprep.subr.mxu0 0.0
    %439 = vmatpush1.msra.mxu0 0.0
    %440 = vmatprep.subr.mxu0 0.0
    %441 = vmatpush1.msra.mxu0 0.0
    %442 = vmatprep.subr.mxu0 0.0
    %443 = vmatpush1.msra.mxu0 0.0
    %444 = vmatprep.subr.mxu0 0.0
    %445 = vmatpush1.msra.mxu0 0.0
    %446 = vmatprep.subr.mxu0 0.0
    %447 = vmatpush1.msra.mxu0 0.0
    %448 = vmatprep.subr.mxu0 0.0
    %449 = vmatpush1.msra.mxu0 0.0
    %450 = vmatprep.subr.mxu0 0.0
    %451 = vmatpush1.msra.mxu0 0.0
    %452 = vmatprep.subr.mxu0 0.0
    %453 = vmatpush1.msra.mxu0 0.0
    %454 = vmatprep.subr.mxu0 0.0
    %455 = vmatpush1.msra.mxu0 0.0
    %456 = vmatprep.subr.mxu0 0.0
    %457 = vmatpush1.msra.mxu0 0.0
    %458 = vmatprep.subr.mxu0 0.0
    %459 = vmatpush1.msra.mxu0 0.0
    %460 = vmatprep.subr.mxu0 0.0
    %461 = vmatpush1.msra.mxu0 0.0
    %462 = vmatprep.subr.mxu0 0.0
    %463 = vmatpush1.msra.mxu0 0.0
    %464 = vmatprep.subr.mxu0 0.0
    %465 = vmatpush1.msra.mxu0 0.0
    %466 = vmatprep.subr.mxu0 0.0
    %467 = vmatpush1.msra.mxu0 0.0
    %468 = vmatprep.subr.mxu0 0.0
    %469 = vmatpush1.msra.mxu0 0.0
    %470 = vmatprep.mubr.f32.mxu0 0.0
    %v471 = vand.u32 %v55, 4294901760
    %472 = vmatmul.mubr.f32.gmra.mrb[0].mxu0 %v471
    %v473 = vpop.f32.mrb[0].mxu0
    %v474 = vadd.f32 %v389, %v473
    %v475 = vpop.f32.mrb[0].mxu0
    %476 = vmatprep.mubr.f32.mxu0 0.0
    %v477 = vand.u32 %v58, 4294901760
    %478 = vmatmul.mubr.f32.gmra.mrb[0].mxu0 %v477
    %v479 = vpop.f32.mrb[0].mxu0
    %v480 = vadd.f32 %v397, %v479
    %v481 = vpop.f32.mrb[0].mxu0
    %482 = vdwg.mxu0
    %483 = vmatprep.subr.mxu0 0.0
    %v484 = vand.u32 %v44, 4294901760
    %485 = vmatpush1.msra.mxu0 %v484
    %486 = vmatprep.subr.mxu0 0.0
    %v487 = vand.u32 %v45, 4294901760
    %488 = vmatpush1.msra.mxu0 %v487
    %489 = vmatprep.subr.mxu0 0.0
    %490 = vmatpush1.msra.mxu0 0.0
    %491 = vmatprep.subr.mxu0 0.0
    %492 = vmatpush1.msra.mxu0 0.0
    %493 = vmatprep.subr.mxu0 0.0
    %494 = vmatpush1.msra.mxu0 0.0
    %495 = vmatprep.subr.mxu0 0.0
    %496 = vmatpush1.msra.mxu0 0.0
    %497 = vmatprep.subr.mxu0 0.0
    %498 = vmatpush1.msra.mxu0 0.0
    %499 = vmatprep.subr.mxu0 0.0
    %500 = vmatpush1.msra.mxu0 0.0
    %501 = vmatprep.subr.mxu0 0.0
    %502 = vmatpush1.msra.mxu0 0.0
    %503 = vmatprep.subr.mxu0 0.0
    %504 = vmatpush1.msra.mxu0 0.0
    %505 = vmatprep.subr.mxu0 0.0
    %506 = vmatpush1.msra.mxu0 0.0
    %507 = vmatprep.subr.mxu0 0.0
    %508 = vmatpush1.msra.mxu0 0.0
    %509 = vmatprep.subr.mxu0 0.0
    %510 = vmatpush1.msra.mxu0 0.0
    %511 = vmatprep.subr.mxu0 0.0
    %512 = vmatpush1.msra.mxu0 0.0
    %513 = vmatprep.subr.mxu0 0.0
    %514 = vmatpush1.msra.mxu0 0.0
    %515 = vmatprep.subr.mxu0 0.0
    %516 = vmatpush1.msra.mxu0 0.0
    %517 = vmatprep.subr.mxu0 0.0
    %518 = vmatpush1.msra.mxu0 0.0
    %519 = vmatprep.subr.mxu0 0.0
    %520 = vmatpush1.msra.mxu0 0.0
    %521 = vmatprep.subr.mxu0 0.0
    %522 = vmatpush1.msra.mxu0 0.0
    %523 = vmatprep.subr.mxu0 0.0
    %524 = vmatpush1.msra.mxu0 0.0
    %525 = vmatprep.subr.mxu0 0.0
    %526 = vmatpush1.msra.mxu0 0.0
    %527 = vmatprep.subr.mxu0 0.0
    %528 = vmatpush1.msra.mxu0 0.0
    %529 = vmatprep.subr.mxu0 0.0
    %530 = vmatpush1.msra.mxu0 0.0
    %531 = vmatprep.subr.mxu0 0.0
    %532 = vmatpush1.msra.mxu0 0.0
    %533 = vmatprep.subr.mxu0 0.0
    %534 = vmatpush1.msra.mxu0 0.0
    %535 = vmatprep.subr.mxu0 0.0
    %536 = vmatpush1.msra.mxu0 0.0
    %537 = vmatprep.subr.mxu0 0.0
    %538 = vmatpush1.msra.mxu0 0.0
    %539 = vmatprep.subr.mxu0 0.0
    %540 = vmatpush1.msra.mxu0 0.0
    %541 = vmatprep.subr.mxu0 0.0
    %542 = vmatpush1.msra.mxu0 0.0
    %543 = vmatprep.subr.mxu0 0.0
    %544 = vmatpush1.msra.mxu0 0.0
    %545 = vmatprep.subr.mxu0 0.0
    %546 = vmatpush1.msra.mxu0 0.0
    %547 = vmatprep.subr.mxu0 0.0
    %548 = vmatpush1.msra.mxu0 0.0
    %549 = vmatprep.mubr.f32.mxu0 0.0
    %v550 = vand.u32 %v55, 4294901760
    %551 = vmatmul.mubr.f32.gmra.mrb[0].mxu0 %v550
    %v552 = vpop.f32.mrb[0].mxu0
    %v553 = vadd.f32 %v474, %v552
    %v554 = vpop.f32.mrb[0].mxu0
    %555 = vmatprep.mubr.f32.mxu0 0.0
    %v556 = vand.u32 %v58, 4294901760
    %557 = vmatmul.mubr.f32.gmra.mrb[0].mxu0 %v556
    %v558 = vpop.f32.mrb[0].mxu0
    %v559 = vadd.f32 %v480, %v558
    %v560 = vpop.f32.mrb[0].mxu0
    %561 = vdwg.mxu0
    %564 = vrot.lane.b32.xlu0 %v44, 112
    %v565 = vpop.permute.xlu0 %564
    %566 = vrot.lane.b32.xlu0 %v45, 112
    %v567 = vpop.permute.xlu0 %566
    %571 = vrot.lane.b32.xlu0 %v52, 112
    %v572 = vpop.permute.xlu0 %571
    %574 = vmatprep.subr.mxu0 0.0
    %v575 = vand.u32 %v565, 4294901760
    %576 = vmatpush1.msra.mxu0 %v575
    %577 = vmatprep.subr.mxu0 0.0
    %v578 = vand.u32 %v567, 4294901760
    %579 = vmatpush1.msra.mxu0 %v578
    %580 = vmatprep.subr.mxu0 0.0
    %581 = vmatpush1.msra.mxu0 0.0
    %582 = vmatprep.subr.mxu0 0.0
    %583 = vmatpush1.msra.mxu0 0.0
    %584 = vmatprep.subr.mxu0 0.0
    %585 = vmatpush1.msra.mxu0 0.0
    %586 = vmatprep.subr.mxu0 0.0
    %587 = vmatpush1.msra.mxu0 0.0
    %588 = vmatprep.subr.mxu0 0.0
    %589 = vmatpush1.msra.mxu0 0.0
    %590 = vmatprep.subr.mxu0 0.0
    %591 = vmatpush1.msra.mxu0 0.0
    %592 = vmatprep.subr.mxu0 0.0
    %593 = vmatpush1.msra.mxu0 0.0
    %594 = vmatprep.subr.mxu0 0.0
    %595 = vmatpush1.msra.mxu0 0.0
    %596 = vmatprep.subr.mxu0 0.0
    %597 = vmatpush1.msra.mxu0 0.0
    %598 = vmatprep.subr.mxu0 0.0
    %599 = vmatpush1.msra.mxu0 0.0
    %600 = vmatprep.subr.mxu0 0.0
    %601 = vmatpush1.msra.mxu0 0.0
    %602 = vmatprep.subr.mxu0 0.0
    %603 = vmatpush1.msra.mxu0 0.0
    %604 = vmatprep.subr.mxu0 0.0
    %605 = vmatpush1.msra.mxu0 0.0
    %606 = vmatprep.subr.mxu0 0.0
    %607 = vmatpush1.msra.mxu0 0.0
    %608 = vmatprep.subr.mxu0 0.0
    %609 = vmatpush1.msra.mxu0 0.0
    %610 = vmatprep.subr.mxu0 0.0
    %611 = vmatpush1.msra.mxu0 0.0
    %612 = vmatprep.subr.mxu0 0.0
    %613 = vmatpush1.msra.mxu0 0.0
    %614 = vmatprep.subr.mxu0 0.0
    %615 = vmatpush1.msra.mxu0 0.0
    %616 = vmatprep.subr.mxu0 0.0
    %617 = vmatpush1.msra.mxu0 0.0
    %618 = vmatprep.subr.mxu0 0.0
    %619 = vmatpush1.msra.mxu0 0.0
    %620 = vmatprep.subr.mxu0 0.0
    %621 = vmatpush1.msra.mxu0 0.0
    %622 = vmatprep.subr.mxu0 0.0
    %623 = vmatpush1.msra.mxu0 0.0
    %624 = vmatprep.subr.mxu0 0.0
    %625 = vmatpush1.msra.mxu0 0.0
    %626 = vmatprep.subr.mxu0 0.0
    %627 = vmatpush1.msra.mxu0 0.0
    %628 = vmatprep.subr.mxu0 0.0
    %629 = vmatpush1.msra.mxu0 0.0
    %630 = vmatprep.subr.mxu0 0.0
    %631 = vmatpush1.msra.mxu0 0.0
    %632 = vmatprep.subr.mxu0 0.0
    %633 = vmatpush1.msra.mxu0 0.0
    %634 = vmatprep.subr.mxu0 0.0
    %635 = vmatpush1.msra.mxu0 0.0
    %636 = vmatprep.subr.mxu0 0.0
    %637 = vmatpush1.msra.mxu0 0.0
    %638 = vmatprep.subr.mxu0 0.0
    %639 = vmatpush1.msra.mxu0 0.0
    %640 = vmatprep.mubr.f32.mxu0 0.0
    %v641 = vand.u32 %v55, 4294901760
    %v642 = vsub.f32 %v55, %v641
    %v643 = vand.u32 %v642, 4294901760
    %v644 = vsub.f32 %v642, %v643
    %v645 = vand.u32 %v644, 4294901760
    %646 = vmatmul.mubr.f32.gmra.mrb[0].mxu0 %v645
    %v647 = vpop.f32.mrb[0].mxu0
    %v648 = vadd.f32 %v572, %v647
    %v649 = vpop.f32.mrb[0].mxu0
    %650 = vmatprep.mubr.f32.mxu0 0.0
    %v651 = vand.u32 %v58, 4294901760
    %v652 = vsub.f32 %v58, %v651
    %v653 = vand.u32 %v652, 4294901760
    %v654 = vsub.f32 %v652, %v653
    %v655 = vand.u32 %v654, 4294901760
    %656 = vmatmul.mubr.f32.gmra.mrb[0].mxu0 %v655
    %v657 = vpop.f32.mrb[0].mxu0
    %v658 = vadd.f32 %v572, %v657
    %v659 = vpop.f32.mrb[0].mxu0
    %660 = vdwg.mxu0
    %661 = vmatprep.subr.mxu0 0.0
    %v662 = vand.u32 %v565, 4294901760
    %v663 = vsub.f32 %v565, %v662
    %v664 = vand.u32 %v663, 4294901760
    %v665 = vsub.f32 %v663, %v664
    %v666 = vand.u32 %v665, 4294901760
    %667 = vmatpush1.msra.mxu0 %v666
    %668 = vmatprep.subr.mxu0 0.0
    %v669 = vand.u32 %v567, 4294901760
    %v670 = vsub.f32 %v567, %v669
    %v671 = vand.u32 %v670, 4294901760
    %v672 = vsub.f32 %v670, %v671
    %v673 = vand.u32 %v672, 4294901760
    %674 = vmatpush1.msra.mxu0 %v673
    %675 = vmatprep.subr.mxu0 0.0
    %676 = vmatpush1.msra.mxu0 0.0
    %677 = vmatprep.subr.mxu0 0.0
    %678 = vmatpush1.msra.mxu0 0.0
    %679 = vmatprep.subr.mxu0 0.0
    %680 = vmatpush1.msra.mxu0 0.0
    %681 = vmatprep.subr.mxu0 0.0
    %682 = vmatpush1.msra.mxu0 0.0
    %683 = vmatprep.subr.mxu0 0.0
    %684 = vmatpush1.msra.mxu0 0.0
    %685 = vmatprep.subr.mxu0 0.0
    %686 = vmatpush1.msra.mxu0 0.0
    %687 = vmatprep.subr.mxu0 0.0
    %688 = vmatpush1.msra.mxu0 0.0
    %689 = vmatprep.subr.mxu0 0.0
    %690 = vmatpush1.msra.mxu0 0.0
    %691 = vmatprep.subr.mxu0 0.0
    %692 = vmatpush1.msra.mxu0 0.0
    %693 = vmatprep.subr.mxu0 0.0
    %694 = vmatpush1.msra.mxu0 0.0
    %695 = vmatprep.subr.mxu0 0.0
    %696 = vmatpush1.msra.mxu0 0.0
    %697 = vmatprep.subr.mxu0 0.0
    %698 = vmatpush1.msra.mxu0 0.0
    %699 = vmatprep.subr.mxu0 0.0
    %700 = vmatpush1.msra.mxu0 0.0
    %701 = vmatprep.subr.mxu0 0.0
    %702 = vmatpush1.msra.mxu0 0.0
    %703 = vmatprep.subr.mxu0 0.0
    %704 = vmatpush1.msra.mxu0 0.0
    %705 = vmatprep.subr.mxu0 0.0
    %706 = vmatpush1.msra.mxu0 0.0
    %707 = vmatprep.subr.mxu0 0.0
    %708 = vmatpush1.msra.mxu0 0.0
    %709 = vmatprep.subr.mxu0 0.0
    %710 = vmatpush1.msra.mxu0 0.0
    %711 = vmatprep.subr.mxu0 0.0
    %712 = vmatpush1.msra.mxu0 0.0
    %713 = vmatprep.subr.mxu0 0.0
    %714 = vmatpush1.msra.mxu0 0.0
    %715 = vmatprep.subr.mxu0 0.0
    %716 = vmatpush1.msra.mxu0 0.0
    %717 = vmatprep.subr.mxu0 0.0
    %718 = vmatpush1.msra.mxu0 0.0
    %719 = vmatprep.subr.mxu0 0.0
    %720 = vmatpush1.msra.mxu0 0.0
    %721 = vmatprep.subr.mxu0 0.0
    %722 = vmatpush1.msra.mxu0 0.0
    %723 = vmatprep.subr.mxu0 0.0
    %724 = vmatpush1.msra.mxu0 0.0
    %725 = vmatprep.subr.mxu0 0.0
    %726 = vmatpush1.msra.mxu0 0.0
    %727 = vmatprep.subr.mxu0 0.0
    %728 = vmatpush1.msra.mxu0 0.0
    %729 = vmatprep.subr.mxu0 0.0
    %730 = vmatpush1.msra.mxu0 0.0
    %731 = vmatprep.subr.mxu0 0.0
    %732 = vmatpush1.msra.mxu0 0.0
    %733 = vmatprep.subr.mxu0 0.0
    %734 = vmatpush1.msra.mxu0 0.0
    %735 = vmatprep.mubr.f32.mxu0 0.0
    %v736 = vand.u32 %v55, 4294901760
    %737 = vmatmul.mubr.f32.gmra.mrb[0].mxu0 %v736
    %v738 = vpop.f32.mrb[0].mxu0
    %v739 = vadd.f32 %v648, %v738
    %v740 = vpop.f32.mrb[0].mxu0
    %741 = vmatprep.mubr.f32.mxu0 0.0
    %v742 = vand.u32 %v58, 4294901760
    %743 = vmatmul.mubr.f32.gmra.mrb[0].mxu0 %v742
    %v744 = vpop.f32.mrb[0].mxu0
    %v745 = vadd.f32 %v658, %v744
    %v746 = vpop.f32.mrb[0].mxu0
    %747 = vdwg.mxu0
    %748 = vmatprep.subr.mxu0 0.0
    %v749 = vand.u32 %v565, 4294901760
    %v750 = vsub.f32 %v565, %v749
    %751 = vmatpush1.msra.mxu0 %v750
    %752 = vmatprep.subr.mxu0 0.0
    %v753 = vand.u32 %v567, 4294901760
    %v754 = vsub.f32 %v567, %v753
    %755 = vmatpush1.msra.mxu0 %v754
    %756 = vmatprep.subr.mxu0 0.0
    %757 = vmatpush1.msra.mxu0 0.0
    %758 = vmatprep.subr.mxu0 0.0
    %759 = vmatpush1.msra.mxu0 0.0
    %760 = vmatprep.subr.mxu0 0.0
    %761 = vmatpush1.msra.mxu0 0.0
    %762 = vmatprep.subr.mxu0 0.0
    %763 = vmatpush1.msra.mxu0 0.0
    %764 = vmatprep.subr.mxu0 0.0
    %765 = vmatpush1.msra.mxu0 0.0
    %766 = vmatprep.subr.mxu0 0.0
    %767 = vmatpush1.msra.mxu0 0.0
    %768 = vmatprep.subr.mxu0 0.0
    %769 = vmatpush1.msra.mxu0 0.0
    %770 = vmatprep.subr.mxu0 0.0
    %771 = vmatpush1.msra.mxu0 0.0
    %772 = vmatprep.subr.mxu0 0.0
    %773 = vmatpush1.msra.mxu0 0.0
    %774 = vmatprep.subr.mxu0 0.0
    %775 = vmatpush1.msra.mxu0 0.0
    %776 = vmatprep.subr.mxu0 0.0
    %777 = vmatpush1.msra.mxu0 0.0
    %778 = vmatprep.subr.mxu0 0.0
    %779 = vmatpush1.msra.mxu0 0.0
    %780 = vmatprep.subr.mxu0 0.0
    %781 = vmatpush1.msra.mxu0 0.0
    %782 = vmatprep.subr.mxu0 0.0
    %783 = vmatpush1.msra.mxu0 0.0
    %784 = vmatprep.subr.mxu0 0.0
    %785 = vmatpush1.msra.mxu0 0.0
    %786 = vmatprep.subr.mxu0 0.0
    %787 = vmatpush1.msra.mxu0 0.0
    %788 = vmatprep.subr.mxu0 0.0
    %789 = vmatpush1.msra.mxu0 0.0
    %790 = vmatprep.subr.mxu0 0.0
    %791 = vmatpush1.msra.mxu0 0.0
    %792 = vmatprep.subr.mxu0 0.0
    %793 = vmatpush1.msra.mxu0 0.0
    %794 = vmatprep.subr.mxu0 0.0
    %795 = vmatpush1.msra.mxu0 0.0
    %796 = vmatprep.subr.mxu0 0.0
    %797 = vmatpush1.msra.mxu0 0.0
    %798 = vmatprep.subr.mxu0 0.0
    %799 = vmatpush1.msra.mxu0 0.0
    %800 = vmatprep.subr.mxu0 0.0
    %801 = vmatpush1.msra.mxu0 0.0
    %802 = vmatprep.subr.mxu0 0.0
    %803 = vmatpush1.msra.mxu0 0.0
    %804 = vmatprep.subr.mxu0 0.0
    %805 = vmatpush1.msra.mxu0 0.0
    %806 = vmatprep.subr.mxu0 0.0
    %807 = vmatpush1.msra.mxu0 0.0
    %808 = vmatprep.subr.mxu0 0.0
    %809 = vmatpush1.msra.mxu0 0.0
    %810 = vmatprep.subr.mxu0 0.0
    %811 = vmatpush1.msra.mxu0 0.0
    %812 = vmatprep.subr.mxu0 0.0
    %813 = vmatpush1.msra.mxu0 0.0
    %814 = vmatprep.subr.mxu0 0.0
    %815 = vmatpush1.msra.mxu0 0.0
    %816 = vmatprep.mubr.f32.mxu0 0.0
    %v817 = vand.u32 %v55, 4294901760
    %v818 = vsub.f32 %v55, %v817
    %819 = vmatmul.mubr.f32.gmra.mrb[0].mxu0 %v818
    %v820 = vpop.f32.mrb[0].mxu0
    %v821 = vadd.f32 %v739, %v820
    %v822 = vpop.f32.mrb[0].mxu0
    %823 = vmatprep.mubr.f32.mxu0 0.0
    %v824 = vand.u32 %v58, 4294901760
    %v825 = vsub.f32 %v58, %v824
    %826 = vmatmul.mubr.f32.gmra.mrb[0].mxu0 %v825
    %v827 = vpop.f32.mrb[0].mxu0
    %v828 = vadd.f32 %v745, %v827
    %v829 = vpop.f32.mrb[0].mxu0
    %830 = vdwg.mxu0
    %831 = vmatprep.subr.mxu0 0.0
    %v832 = vand.u32 %v565, 4294901760
    %833 = vmatpush1.msra.mxu0 %v832
    %834 = vmatprep.subr.mxu0 0.0
    %v835 = vand.u32 %v567, 4294901760
    %836 = vmatpush1.msra.mxu0 %v835
    %837 = vmatprep.subr.mxu0 0.0
    %838 = vmatpush1.msra.mxu0 0.0
    %839 = vmatprep.subr.mxu0 0.0
    %840 = vmatpush1.msra.mxu0 0.0
    %841 = vmatprep.subr.mxu0 0.0
    %842 = vmatpush1.msra.mxu0 0.0
    %843 = vmatprep.subr.mxu0 0.0
    %844 = vmatpush1.msra.mxu0 0.0
    %845 = vmatprep.subr.mxu0 0.0
    %846 = vmatpush1.msra.mxu0 0.0
    %847 = vmatprep.subr.mxu0 0.0
    %848 = vmatpush1.msra.mxu0 0.0
    %849 = vmatprep.subr.mxu0 0.0
    %850 = vmatpush1.msra.mxu0 0.0
    %851 = vmatprep.subr.mxu0 0.0
    %852 = vmatpush1.msra.mxu0 0.0
    %853 = vmatprep.subr.mxu0 0.0
    %854 = vmatpush1.msra.mxu0 0.0
    %855 = vmatprep.subr.mxu0 0.0
    %856 = vmatpush1.msra.mxu0 0.0
    %857 = vmatprep.subr.mxu0 0.0
    %858 = vmatpush1.msra.mxu0 0.0
    %859 = vmatprep.subr.mxu0 0.0
    %860 = vmatpush1.msra.mxu0 0.0
    %861 = vmatprep.subr.mxu0 0.0
    %862 = vmatpush1.msra.mxu0 0.0
    %863 = vmatprep.subr.mxu0 0.0
    %864 = vmatpush1.msra.mxu0 0.0
    %865 = vmatprep.subr.mxu0 0.0
    %866 = vmatpush1.msra.mxu0 0.0
    %867 = vmatprep.subr.mxu0 0.0
    %868 = vmatpush1.msra.mxu0 0.0
    %869 = vmatprep.subr.mxu0 0.0
    %870 = vmatpush1.msra.mxu0 0.0
    %871 = vmatprep.subr.mxu0 0.0
    %872 = vmatpush1.msra.mxu0 0.0
    %873 = vmatprep.subr.mxu0 0.0
    %874 = vmatpush1.msra.mxu0 0.0
    %875 = vmatprep.subr.mxu0 0.0
    %876 = vmatpush1.msra.mxu0 0.0
    %877 = vmatprep.subr.mxu0 0.0
    %878 = vmatpush1.msra.mxu0 0.0
    %879 = vmatprep.subr.mxu0 0.0
    %880 = vmatpush1.msra.mxu0 0.0
    %881 = vmatprep.subr.mxu0 0.0
    %882 = vmatpush1.msra.mxu0 0.0
    %883 = vmatprep.subr.mxu0 0.0
    %884 = vmatpush1.msra.mxu0 0.0
    %885 = vmatprep.subr.mxu0 0.0
    %886 = vmatpush1.msra.mxu0 0.0
    %887 = vmatprep.subr.mxu0 0.0
    %888 = vmatpush1.msra.mxu0 0.0
    %889 = vmatprep.subr.mxu0 0.0
    %890 = vmatpush1.msra.mxu0 0.0
    %891 = vmatprep.subr.mxu0 0.0
    %892 = vmatpush1.msra.mxu0 0.0
    %893 = vmatprep.subr.mxu0 0.0
    %894 = vmatpush1.msra.mxu0 0.0
    %895 = vmatprep.subr.mxu0 0.0
    %896 = vmatpush1.msra.mxu0 0.0
    %897 = vmatprep.mubr.f32.mxu0 0.0
    %v898 = vand.u32 %v55, 4294901760
    %v899 = vsub.f32 %v55, %v898
    %v900 = vand.u32 %v899, 4294901760
    %901 = vmatmul.mubr.f32.gmra.mrb[0].mxu0 %v900
    %v902 = vpop.f32.mrb[0].mxu0
    %v903 = vadd.f32 %v821, %v902
    %v904 = vpop.f32.mrb[0].mxu0
    %905 = vmatprep.mubr.f32.mxu0 0.0
    %v906 = vand.u32 %v58, 4294901760
    %v907 = vsub.f32 %v58, %v906
    %v908 = vand.u32 %v907, 4294901760
    %909 = vmatmul.mubr.f32.gmra.mrb[0].mxu0 %v908
    %v910 = vpop.f32.mrb[0].mxu0
    %v911 = vadd.f32 %v828, %v910
    %v912 = vpop.f32.mrb[0].mxu0
    %913 = vdwg.mxu0
    %914 = vmatprep.subr.mxu0 0.0
    %v915 = vand.u32 %v565, 4294901760
    %v916 = vsub.f32 %v565, %v915
    %v917 = vand.u32 %v916, 4294901760
    %918 = vmatpush1.msra.mxu0 %v917
    %919 = vmatprep.subr.mxu0 0.0
    %v920 = vand.u32 %v567, 4294901760
    %v921 = vsub.f32 %v567, %v920
    %v922 = vand.u32 %v921, 4294901760
    %923 = vmatpush1.msra.mxu0 %v922
    %924 = vmatprep.subr.mxu0 0.0
    %925 = vmatpush1.msra.mxu0 0.0
    %926 = vmatprep.subr.mxu0 0.0
    %927 = vmatpush1.msra.mxu0 0.0
    %928 = vmatprep.subr.mxu0 0.0
    %929 = vmatpush1.msra.mxu0 0.0
    %930 = vmatprep.subr.mxu0 0.0
    %931 = vmatpush1.msra.mxu0 0.0
    %932 = vmatprep.subr.mxu0 0.0
    %933 = vmatpush1.msra.mxu0 0.0
    %934 = vmatprep.subr.mxu0 0.0
    %935 = vmatpush1.msra.mxu0 0.0
    %936 = vmatprep.subr.mxu0 0.0
    %937 = vmatpush1.msra.mxu0 0.0
    %938 = vmatprep.subr.mxu0 0.0
    %939 = vmatpush1.msra.mxu0 0.0
    %940 = vmatprep.subr.mxu0 0.0
    %941 = vmatpush1.msra.mxu0 0.0
    %942 = vmatprep.subr.mxu0 0.0
    %943 = vmatpush1.msra.mxu0 0.0
    %944 = vmatprep.subr.mxu0 0.0
    %945 = vmatpush1.msra.mxu0 0.0
    %946 = vmatprep.subr.mxu0 0.0
    %947 = vmatpush1.msra.mxu0 0.0
    %948 = vmatprep.subr.mxu0 0.0
    %949 = vmatpush1.msra.mxu0 0.0
    %950 = vmatprep.subr.mxu0 0.0
    %951 = vmatpush1.msra.mxu0 0.0
    %952 = vmatprep.subr.mxu0 0.0
    %953 = vmatpush1.msra.mxu0 0.0
    %954 = vmatprep.subr.mxu0 0.0
    %955 = vmatpush1.msra.mxu0 0.0
    %956 = vmatprep.subr.mxu0 0.0
    %957 = vmatpush1.msra.mxu0 0.0
    %958 = vmatprep.subr.mxu0 0.0
    %959 = vmatpush1.msra.mxu0 0.0
    %960 = vmatprep.subr.mxu0 0.0
    %961 = vmatpush1.msra.mxu0 0.0
    %962 = vmatprep.subr.mxu0 0.0
    %963 = vmatpush1.msra.mxu0 0.0
    %964 = vmatprep.subr.mxu0 0.0
    %965 = vmatpush1.msra.mxu0 0.0
    %966 = vmatprep.subr.mxu0 0.0
    %967 = vmatpush1.msra.mxu0 0.0
    %968 = vmatprep.subr.mxu0 0.0
    %969 = vmatpush1.msra.mxu0 0.0
    %970 = vmatprep.subr.mxu0 0.0
    %971 = vmatpush1.msra.mxu0 0.0
    %972 = vmatprep.subr.mxu0 0.0
    %973 = vmatpush1.msra.mxu0 0.0
    %974 = vmatprep.subr.mxu0 0.0
    %975 = vmatpush1.msra.mxu0 0.0
    %976 = vmatprep.subr.mxu0 0.0
    %977 = vmatpush1.msra.mxu0 0.0
    %978 = vmatprep.subr.mxu0 0.0
    %979 = vmatpush1.msra.mxu0 0.0
    %980 = vmatprep.subr.mxu0 0.0
    %981 = vmatpush1.msra.mxu0 0.0
    %982 = vmatprep.subr.mxu0 0.0
    %983 = vmatpush1.msra.mxu0 0.0
    %984 = vmatprep.mubr.f32.mxu0 0.0
    %v985 = vand.u32 %v55, 4294901760
    %986 = vmatmul.mubr.f32.gmra.mrb[0].mxu0 %v985
    %v987 = vpop.f32.mrb[0].mxu0
    %v988 = vadd.f32 %v903, %v987
    %v989 = vpop.f32.mrb[0].mxu0
    %990 = vmatprep.mubr.f32.mxu0 0.0
    %v991 = vand.u32 %v58, 4294901760
    %992 = vmatmul.mubr.f32.gmra.mrb[0].mxu0 %v991
    %v993 = vpop.f32.mrb[0].mxu0
    %v994 = vadd.f32 %v911, %v993
    %v995 = vpop.f32.mrb[0].mxu0
    %996 = vdwg.mxu0
    %997 = vmatprep.subr.mxu0 0.0
    %v998 = vand.u32 %v565, 4294901760
    %999 = vmatpush1.msra.mxu0 %v998
    %1000 = vmatprep.subr.mxu0 0.0
    %v1001 = vand.u32 %v567, 4294901760
    %1002 = vmatpush1.msra.mxu0 %v1001
    %1003 = vmatprep.subr.mxu0 0.0
    %1004 = vmatpush1.msra.mxu0 0.0
    %1005 = vmatprep.subr.mxu0 0.0
    %1006 = vmatpush1.msra.mxu0 0.0
    %1007 = vmatprep.subr.mxu0 0.0
    %1008 = vmatpush1.msra.mxu0 0.0
    %1009 = vmatprep.subr.mxu0 0.0
    %1010 = vmatpush1.msra.mxu0 0.0
    %1011 = vmatprep.subr.mxu0 0.0
    %1012 = vmatpush1.msra.mxu0 0.0
    %1013 = vmatprep.subr.mxu0 0.0
    %1014 = vmatpush1.msra.mxu0 0.0
    %1015 = vmatprep.subr.mxu0 0.0
    %1016 = vmatpush1.msra.mxu0 0.0
    %1017 = vmatprep.subr.mxu0 0.0
    %1018 = vmatpush1.msra.mxu0 0.0
    %1019 = vmatprep.subr.mxu0 0.0
    %1020 = vmatpush1.msra.mxu0 0.0
    %1021 = vmatprep.subr.mxu0 0.0
    %1022 = vmatpush1.msra.mxu0 0.0
    %1023 = vmatprep.subr.mxu0 0.0
    %1024 = vmatpush1.msra.mxu0 0.0
    %1025 = vmatprep.subr.mxu0 0.0
    %1026 = vmatpush1.msra.mxu0 0.0
    %1027 = vmatprep.subr.mxu0 0.0
    %1028 = vmatpush1.msra.mxu0 0.0
    %1029 = vmatprep.subr.mxu0 0.0
    %1030 = vmatpush1.msra.mxu0 0.0
    %1031 = vmatprep.subr.mxu0 0.0
    %1032 = vmatpush1.msra.mxu0 0.0
    %1033 = vmatprep.subr.mxu0 0.0
    %1034 = vmatpush1.msra.mxu0 0.0
    %1035 = vmatprep.subr.mxu0 0.0
    %1036 = vmatpush1.msra.mxu0 0.0
    %1037 = vmatprep.subr.mxu0 0.0
    %1038 = vmatpush1.msra.mxu0 0.0
    %1039 = vmatprep.subr.mxu0 0.0
    %1040 = vmatpush1.msra.mxu0 0.0
    %1041 = vmatprep.subr.mxu0 0.0
    %1042 = vmatpush1.msra.mxu0 0.0
    %1043 = vmatprep.subr.mxu0 0.0
    %1044 = vmatpush1.msra.mxu0 0.0
    %1045 = vmatprep.subr.mxu0 0.0
    %1046 = vmatpush1.msra.mxu0 0.0
    %1047 = vmatprep.subr.mxu0 0.0
    %1048 = vmatpush1.msra.mxu0 0.0
    %1049 = vmatprep.subr.mxu0 0.0
    %1050 = vmatpush1.msra.mxu0 0.0
    %1051 = vmatprep.subr.mxu0 0.0
    %1052 = vmatpush1.msra.mxu0 0.0
    %1053 = vmatprep.subr.mxu0 0.0
    %1054 = vmatpush1.msra.mxu0 0.0
    %1055 = vmatprep.subr.mxu0 0.0
    %1056 = vmatpush1.msra.mxu0 0.0
    %1057 = vmatprep.subr.mxu0 0.0
    %1058 = vmatpush1.msra.mxu0 0.0
    %1059 = vmatprep.subr.mxu0 0.0
    %1060 = vmatpush1.msra.mxu0 0.0
    %1061 = vmatprep.subr.mxu0 0.0
    %1062 = vmatpush1.msra.mxu0 0.0
    %1063 = vmatprep.mubr.f32.mxu0 0.0
    %v1064 = vand.u32 %v55, 4294901760
    %1065 = vmatmul.mubr.f32.gmra.mrb[0].mxu0 %v1064
    %v1066 = vpop.f32.mrb[0].mxu0
    %v1067 = vadd.f32 %v988, %v1066
    %v1068 = vpop.f32.mrb[0].mxu0
    %1069 = vmatprep.mubr.f32.mxu0 0.0
    %v1070 = vand.u32 %v58, 4294901760
    %1071 = vmatmul.mubr.f32.gmra.mrb[0].mxu0 %v1070
    %v1072 = vpop.f32.mrb[0].mxu0
    %v1073 = vadd.f32 %v994, %v1072
    %v1074 = vpop.f32.mrb[0].mxu0
    %1075 = vdwg.mxu0
    %v1076 = vmul.f32 %v1067, 0.5
    %v1077 = vmul.f32 %v1073, 0.5
    %v1078 = vmul.f32 %v1067, 0.70710677
    %v1079 = vmul.f32 %v1073, 0.70710677
    %vm1080 = vcmp.ge.f32.partialorder %v1078, 0.0
    %vm1081 = vcmp.ge.f32.partialorder %v1079, 0.0
    %v1082 = vsel %vm1080, 1.0, -1.0
    %v1083 = vsel %vm1081, 1.0, -1.0
    %v1084 = vand.u32 2147483647, %v1078
    %v1085 = vand.u32 2147483647, %v1079
    %v1086 = vmul.f32 %v1084, 0.3275911
    %v1087 = vmul.f32 %v1085, 0.3275911
    %v1088 = vadd.f32 %v1086, 1.0
    %v1089 = vadd.f32 %v1087, 1.0
    %v1090 = vrcp.pop %v1088
    %v1091 = vrcp.pop %v1089
    %v1092 = vmul.f32 %v1090, 1.0614054
    %v1093 = vmul.f32 %v1091, 1.0614054
    %v1094 = vadd.f32 %v1092, -1.4531521
    %v1095 = vadd.f32 %v1093, -1.4531521
    %v1096 = vmul.f32 %v1094, %v1090
    %v1097 = vmul.f32 %v1095, %v1091
    %v1098 = vadd.f32 %v1096, 1.4214138
    %v1099 = vadd.f32 %v1097, 1.4214138
    %v1100 = vmul.f32 %v1098, %v1090
    %v1101 = vmul.f32 %v1099, %v1091
    %v1102 = vadd.f32 %v1100, -0.28449672
    %v1103 = vadd.f32 %v1101, -0.28449672
    %v1104 = vmul.f32 %v1102, %v1090
    %v1105 = vmul.f32 %v1103, %v1091
    %v1106 = vadd.f32 %v1104, 0.2548296
    %v1107 = vadd.f32 %v1105, 0.2548296
    %v1108 = vmul.f32 %v1106, %v1090
    %v1109 = vmul.f32 %v1107, %v1091
    %v1110 = vsub.f32 0.0, %v1084
    %v1111 = vsub.f32 0.0, %v1085
    %v1112 = vmul.f32 %v1110, %v1084
    %v1113 = vmul.f32 %v1111, %v1085
    %v1114 = vmul.f32 %v1112, 1.442695
    %v1115 = vpow.pop %v1114
    %v1116 = vmul.f32 %v1113, 1.442695
    %v1117 = vpow.pop %v1116
    %v1118 = vmul.f32 %v1108, %v1115
    %v1119 = vmul.f32 %v1109, %v1117
    %v1120 = vsub.f32 1.0, %v1118
    %v1121 = vsub.f32 1.0, %v1119
    %v1122 = vmul.f32 %v1082, %v1120
    %v1123 = vmul.f32 %v1083, %v1121
    %v1124 = vadd.f32 %v1122, 1.0
    %v1125 = vadd.f32 %v1123, 1.0
    %v1126 = vmul.f32 %v1076, %v1124
    %v1127 = vmul.f32 %v1077, %v1125
    %1130 = vrot.lane.b32.xlu0 %v44, 80
    %v1131 = vpop.permute.xlu0 %1130
    %1132 = vrot.lane.b32.xlu0 %v45, 80
    %v1133 = vpop.permute.xlu0 %1132
    %1134 = vrot.lane.b32.xlu0 %v46, 80
    %v1135 = vpop.permute.xlu0 %1134
    %1136 = vrot.lane.b32.xlu0 %v47, 80
    %v1137 = vpop.permute.xlu0 %1136
    %1142 = vrot.lane.b32.xlu0 %v52, 80
    %v1143 = vpop.permute.xlu0 %1142
    %vm1145 = vcmask 261120
    %v1147 = vsel %vm1145, %v1126, 0
    %v1150 = vsel %vm1145, %v1127, 0
    %1152 = vmatprep.subr.mxu0 0.0
    %v1153 = vand.u32 %v1131, 4294901760
    %1154 = vmatpush1.msra.mxu0 %v1153
    %1155 = vmatprep.subr.mxu0 0.0
    %v1156 = vand.u32 %v1133, 4294901760
    %1157 = vmatpush1.msra.mxu0 %v1156
    %1158 = vmatprep.subr.mxu0 0.0
    %v1159 = vand.u32 %v1135, 4294901760
    %1160 = vmatpush1.msra.mxu0 %v1159
    %1161 = vmatprep.subr.mxu0 0.0
    %v1162 = vand.u32 %v1137, 4294901760
    %1163 = vmatpush1.msra.mxu0 %v1162
    %1164 = vmatprep.subr.mxu0 0.0
    %1165 = vmatpush1.msra.mxu0 0.0
    %1166 = vmatprep.subr.mxu0 0.0
    %1167 = vmatpush1.msra.mxu0 0.0
    %1168 = vmatprep.subr.mxu0 0.0
    %1169 = vmatpush1.msra.mxu0 0.0
    %1170 = vmatprep.subr.mxu0 0.0
    %1171 = vmatpush1.msra.mxu0 0.0
    %1172 = vmatprep.subr.mxu0 0.0
    %1173 = vmatpush1.msra.mxu0 0.0
    %1174 = vmatprep.subr.mxu0 0.0
    %1175 = vmatpush1.msra.mxu0 0.0
    %1176 = vmatprep.subr.mxu0 0.0
    %1177 = vmatpush1.msra.mxu0 0.0
    %1178 = vmatprep.subr.mxu0 0.0
    %1179 = vmatpush1.msra.mxu0 0.0
    %1180 = vmatprep.subr.mxu0 0.0
    %1181 = vmatpush1.msra.mxu0 0.0
    %1182 = vmatprep.subr.mxu0 0.0
    %1183 = vmatpush1.msra.mxu0 0.0
    %1184 = vmatprep.subr.mxu0 0.0
    %1185 = vmatpush1.msra.mxu0 0.0
    %1186 = vmatprep.subr.mxu0 0.0
    %1187 = vmatpush1.msra.mxu0 0.0
    %1188 = vmatprep.subr.mxu0 0.0
    %1189 = vmatpush1.msra.mxu0 0.0
    %1190 = vmatprep.subr.mxu0 0.0
    %1191 = vmatpush1.msra.mxu0 0.0
    %1192 = vmatprep.subr.mxu0 0.0
    %1193 = vmatpush1.msra.mxu0 0.0
    %1194 = vmatprep.subr.mxu0 0.0
    %1195 = vmatpush1.msra.mxu0 0.0
    %1196 = vmatprep.subr.mxu0 0.0
    %1197 = vmatpush1.msra.mxu0 0.0
    %1198 = vmatprep.subr.mxu0 0.0
    %1199 = vmatpush1.msra.mxu0 0.0
    %1200 = vmatprep.subr.mxu0 0.0
    %1201 = vmatpush1.msra.mxu0 0.0
    %1202 = vmatprep.subr.mxu0 0.0
    %1203 = vmatpush1.msra.mxu0 0.0
    %1204 = vmatprep.subr.mxu0 0.0
    %1205 = vmatpush1.msra.mxu0 0.0
    %1206 = vmatprep.subr.mxu0 0.0
    %1207 = vmatpush1.msra.mxu0 0.0
    %1208 = vmatprep.subr.mxu0 0.0
    %1209 = vmatpush1.msra.mxu0 0.0
    %1210 = vmatprep.subr.mxu0 0.0
    %1211 = vmatpush1.msra.mxu0 0.0
    %1212 = vmatprep.subr.mxu0 0.0
    %1213 = vmatpush1.msra.mxu0 0.0
    %1214 = vmatprep.subr.mxu0 0.0
    %1215 = vmatpush1.msra.mxu0 0.0
    %1216 = vmatprep.subr.mxu0 0.0
    %1217 = vmatpush1.msra.mxu0 0.0
    %1218 = vmatprep.subr.mxu0 0.0
    %1219 = vmatpush1.msra.mxu0 0.0
    %1220 = vmatprep.mubr.f32.mxu0 0.0
    %v1221 = vand.u32 %v1147, 4294901760
    %v1222 = vsub.f32 %v1147, %v1221
    %v1223 = vand.u32 %v1222, 4294901760
    %v1224 = vsub.f32 %v1222, %v1223
    %v1225 = vand.u32 %v1224, 4294901760
    %1226 = vmatmul.mubr.f32.gmra.mrb[0].mxu0 %v1225
    %v1227 = vpop.f32.mrb[0].mxu0
    %v1228 = vadd.f32 %v1143, %v1227
    %v1229 = vpop.f32.mrb[0].mxu0
    %1230 = vmatprep.mubr.f32.mxu0 0.0
    %v1231 = vand.u32 %v1150, 4294901760
    %v1232 = vsub.f32 %v1150, %v1231
    %v1233 = vand.u32 %v1232, 4294901760
    %v1234 = vsub.f32 %v1232, %v1233
    %v1235 = vand.u32 %v1234, 4294901760
    %1236 = vmatmul.mubr.f32.gmra.mrb[0].mxu0 %v1235
    %v1237 = vpop.f32.mrb[0].mxu0
    %v1238 = vadd.f32 %v1143, %v1237
    %v1239 = vpop.f32.mrb[0].mxu0
    %1240 = vdwg.mxu0
    %1241 = vmatprep.subr.mxu0 0.0
    %v1242 = vand.u32 %v1131, 4294901760
    %v1243 = vsub.f32 %v1131, %v1242
    %v1244 = vand.u32 %v1243, 4294901760
    %v1245 = vsub.f32 %v1243, %v1244
    %v1246 = vand.u32 %v1245, 4294901760
    %1247 = vmatpush1.msra.mxu0 %v1246
    %1248 = vmatprep.subr.mxu0 0.0
    %v1249 = vand.u32 %v1133, 4294901760
    %v1250 = vsub.f32 %v1133, %v1249
    %v1251 = vand.u32 %v1250, 4294901760
    %v1252 = vsub.f32 %v1250, %v1251
    %v1253 = vand.u32 %v1252, 4294901760
    %1254 = vmatpush1.msra.mxu0 %v1253
    %1255 = vmatprep.subr.mxu0 0.0
    %v1256 = vand.u32 %v1135, 4294901760
    %v1257 = vsub.f32 %v1135, %v1256
    %v1258 = vand.u32 %v1257, 4294901760
    %v1259 = vsub.f32 %v1257, %v1258
    %v1260 = vand.u32 %v1259, 4294901760
    %1261 = vmatpush1.msra.mxu0 %v1260
    %1262 = vmatprep.subr.mxu0 0.0
    %v1263 = vand.u32 %v1137, 4294901760
    %v1264 = vsub.f32 %v1137, %v1263
    %v1265 = vand.u32 %v1264, 4294901760
    %v1266 = vsub.f32 %v1264, %v1265
    %v1267 = vand.u32 %v1266, 4294901760
    %1268 = vmatpush1.msra.mxu0 %v1267
    %1269 = vmatprep.subr.mxu0 0.0
    %1270 = vmatpush1.msra.mxu0 0.0
    %1271 = vmatprep.subr.mxu0 0.0
    %1272 = vmatpush1.msra.mxu0 0.0
    %1273 = vmatprep.subr.mxu0 0.0
    %1274 = vmatpush1.msra.mxu0 0.0
    %1275 = vmatprep.subr.mxu0 0.0
    %1276 = vmatpush1.msra.mxu0 0.0
    %1277 = vmatprep.subr.mxu0 0.0
    %1278 = vmatpush1.msra.mxu0 0.0
    %1279 = vmatprep.subr.mxu0 0.0
    %1280 = vmatpush1.msra.mxu0 0.0
    %1281 = vmatprep.subr.mxu0 0.0
    %1282 = vmatpush1.msra.mxu0 0.0
    %1283 = vmatprep.subr.mxu0 0.0
    %1284 = vmatpush1.msra.mxu0 0.0
    %1285 = vmatprep.subr.mxu0 0.0
    %1286 = vmatpush1.msra.mxu0 0.0
    %1287 = vmatprep.subr.mxu0 0.0
    %1288 = vmatpush1.msra.mxu0 0.0
    %1289 = vmatprep.subr.mxu0 0.0
    %1290 = vmatpush1.msra.mxu0 0.0
    %1291 = vmatprep.subr.mxu0 0.0
    %1292 = vmatpush1.msra.mxu0 0.0
    %1293 = vmatprep.subr.mxu0 0.0
    %1294 = vmatpush1.msra.mxu0 0.0
    %1295 = vmatprep.subr.mxu0 0.0
    %1296 = vmatpush1.msra.mxu0 0.0
    %1297 = vmatprep.subr.mxu0 0.0
    %1298 = vmatpush1.msra.mxu0 0.0
    %1299 = vmatprep.subr.mxu0 0.0
    %1300 = vmatpush1.msra.mxu0 0.0
    %1301 = vmatprep.subr.mxu0 0.0
    %1302 = vmatpush1.msra.mxu0 0.0
    %1303 = vmatprep.subr.mxu0 0.0
    %1304 = vmatpush1.msra.mxu0 0.0
    %1305 = vmatprep.subr.mxu0 0.0
    %1306 = vmatpush1.msra.mxu0 0.0
    %1307 = vmatprep.subr.mxu0 0.0
    %1308 = vmatpush1.msra.mxu0 0.0
    %1309 = vmatprep.subr.mxu0 0.0
    %1310 = vmatpush1.msra.mxu0 0.0
    %1311 = vmatprep.subr.mxu0 0.0
    %1312 = vmatpush1.msra.mxu0 0.0
    %1313 = vmatprep.subr.mxu0 0.0
    %1314 = vmatpush1.msra.mxu0 0.0
    %1315 = vmatprep.subr.mxu0 0.0
    %1316 = vmatpush1.msra.mxu0 0.0
    %1317 = vmatprep.subr.mxu0 0.0
    %1318 = vmatpush1.msra.mxu0 0.0
    %1319 = vmatprep.subr.mxu0 0.0
    %1320 = vmatpush1.msra.mxu0 0.0
    %1321 = vmatprep.subr.mxu0 0.0
    %1322 = vmatpush1.msra.mxu0 0.0
    %1323 = vmatprep.subr.mxu0 0.0
    %1324 = vmatpush1.msra.mxu0 0.0
    %1325 = vmatprep.mubr.f32.mxu0 0.0
    %v1326 = vand.u32 %v1147, 4294901760
    %1327 = vmatmul.mubr.f32.gmra.mrb[0].mxu0 %v1326
    %v1328 = vpop.f32.mrb[0].mxu0
    %v1329 = vadd.f32 %v1228, %v1328
    %v1330 = vpop.f32.mrb[0].mxu0
    %1331 = vmatprep.mubr.f32.mxu0 0.0
    %v1332 = vand.u32 %v1150, 4294901760
    %1333 = vmatmul.mubr.f32.gmra.mrb[0].mxu0 %v1332
    %v1334 = vpop.f32.mrb[0].mxu0
    %v1335 = vadd.f32 %v1238, %v1334
    %v1336 = vpop.f32.mrb[0].mxu0
    %1337 = vdwg.mxu0
    %1338 = vmatprep.subr.mxu0 0.0
    %v1339 = vand.u32 %v1131, 4294901760
    %v1340 = vsub.f32 %v1131, %v1339
    %1341 = vmatpush1.msra.mxu0 %v1340
    %1342 = vmatprep.subr.mxu0 0.0
    %v1343 = vand.u32 %v1133, 4294901760
    %v1344 = vsub.f32 %v1133, %v1343
    %1345 = vmatpush1.msra.mxu0 %v1344
    %1346 = vmatprep.subr.mxu0 0.0
    %v1347 = vand.u32 %v1135, 4294901760
    %v1348 = vsub.f32 %v1135, %v1347
    %1349 = vmatpush1.msra.mxu0 %v1348
    %1350 = vmatprep.subr.mxu0 0.0
    %v1351 = vand.u32 %v1137, 4294901760
    %v1352 = vsub.f32 %v1137, %v1351
    %1353 = vmatpush1.msra.mxu0 %v1352
    %1354 = vmatprep.subr.mxu0 0.0
    %1355 = vmatpush1.msra.mxu0 0.0
    %1356 = vmatprep.subr.mxu0 0.0
    %1357 = vmatpush1.msra.mxu0 0.0
    %1358 = vmatprep.subr.mxu0 0.0
    %1359 = vmatpush1.msra.mxu0 0.0
    %1360 = vmatprep.subr.mxu0 0.0
    %1361 = vmatpush1.msra.mxu0 0.0
    %1362 = vmatprep.subr.mxu0 0.0
    %1363 = vmatpush1.msra.mxu0 0.0
    %1364 = vmatprep.subr.mxu0 0.0
    %1365 = vmatpush1.msra.mxu0 0.0
    %1366 = vmatprep.subr.mxu0 0.0
    %1367 = vmatpush1.msra.mxu0 0.0
    %1368 = vmatprep.subr.mxu0 0.0
    %1369 = vmatpush1.msra.mxu0 0.0
    %1370 = vmatprep.subr.mxu0 0.0
    %1371 = vmatpush1.msra.mxu0 0.0
    %1372 = vmatprep.subr.mxu0 0.0
    %1373 = vmatpush1.msra.mxu0 0.0
    %1374 = vmatprep.subr.mxu0 0.0
    %1375 = vmatpush1.msra.mxu0 0.0
    %1376 = vmatprep.subr.mxu0 0.0
    %1377 = vmatpush1.msra.mxu0 0.0
    %1378 = vmatprep.subr.mxu0 0.0
    %1379 = vmatpush1.msra.mxu0 0.0
    %1380 = vmatprep.subr.mxu0 0.0
    %1381 = vmatpush1.msra.mxu0 0.0
    %1382 = vmatprep.subr.mxu0 0.0
    %1383 = vmatpush1.msra.mxu0 0.0
    %1384 = vmatprep.subr.mxu0 0.0
    %1385 = vmatpush1.msra.mxu0 0.0
    %1386 = vmatprep.subr.mxu0 0.0
    %1387 = vmatpush1.msra.mxu0 0.0
    %1388 = vmatprep.subr.mxu0 0.0
    %1389 = vmatpush1.msra.mxu0 0.0
    %1390 = vmatprep.subr.mxu0 0.0
    %1391 = vmatpush1.msra.mxu0 0.0
    %1392 = vmatprep.subr.mxu0 0.0
    %1393 = vmatpush1.msra.mxu0 0.0
    %1394 = vmatprep.subr.mxu0 0.0
    %1395 = vmatpush1.msra.mxu0 0.0
    %1396 = vmatprep.subr.mxu0 0.0
    %1397 = vmatpush1.msra.mxu0 0.0
    %1398 = vmatprep.subr.mxu0 0.0
    %1399 = vmatpush1.msra.mxu0 0.0
    %1400 = vmatprep.subr.mxu0 0.0
    %1401 = vmatpush1.msra.mxu0 0.0
    %1402 = vmatprep.subr.mxu0 0.0
    %1403 = vmatpush1.msra.mxu0 0.0
    %1404 = vmatprep.subr.mxu0 0.0
    %1405 = vmatpush1.msra.mxu0 0.0
    %1406 = vmatprep.subr.mxu0 0.0
    %1407 = vmatpush1.msra.mxu0 0.0
    %1408 = vmatprep.subr.mxu0 0.0
    %1409 = vmatpush1.msra.mxu0 0.0
    %1410 = vmatprep.mubr.f32.mxu0 0.0
    %v1411 = vand.u32 %v1147, 4294901760
    %v1412 = vsub.f32 %v1147, %v1411
    %1413 = vmatmul.mubr.f32.gmra.mrb[0].mxu0 %v1412
    %v1414 = vpop.f32.mrb[0].mxu0
    %v1415 = vadd.f32 %v1329, %v1414
    %v1416 = vpop.f32.mrb[0].mxu0
    %1417 = vmatprep.mubr.f32.mxu0 0.0
    %v1418 = vand.u32 %v1150, 4294901760
    %v1419 = vsub.f32 %v1150, %v1418
    %1420 = vmatmul.mubr.f32.gmra.mrb[0].mxu0 %v1419
    %v1421 = vpop.f32.mrb[0].mxu0
    %v1422 = vadd.f32 %v1335, %v1421
    %v1423 = vpop.f32.mrb[0].mxu0
    %1424 = vdwg.mxu0
    %1425 = vmatprep.subr.mxu0 0.0
    %v1426 = vand.u32 %v1131, 4294901760
    %1427 = vmatpush1.msra.mxu0 %v1426
    %1428 = vmatprep.subr.mxu0 0.0
    %v1429 = vand.u32 %v1133, 4294901760
    %1430 = vmatpush1.msra.mxu0 %v1429
    %1431 = vmatprep.subr.mxu0 0.0
    %v1432 = vand.u32 %v1135, 4294901760
    %1433 = vmatpush1.msra.mxu0 %v1432
    %1434 = vmatprep.subr.mxu0 0.0
    %v1435 = vand.u32 %v1137, 4294901760
    %1436 = vmatpush1.msra.mxu0 %v1435
    %1437 = vmatprep.subr.mxu0 0.0
    %1438 = vmatpush1.msra.mxu0 0.0
    %1439 = vmatprep.subr.mxu0 0.0
    %1440 = vmatpush1.msra.mxu0 0.0
    %1441 = vmatprep.subr.mxu0 0.0
    %1442 = vmatpush1.msra.mxu0 0.0
    %1443 = vmatprep.subr.mxu0 0.0
    %1444 = vmatpush1.msra.mxu0 0.0
    %1445 = vmatprep.subr.mxu0 0.0
    %1446 = vmatpush1.msra.mxu0 0.0
    %1447 = vmatprep.subr.mxu0 0.0
    %1448 = vmatpush1.msra.mxu0 0.0
    %1449 = vmatprep.subr.mxu0 0.0
    %1450 = vmatpush1.msra.mxu0 0.0
    %1451 = vmatprep.subr.mxu0 0.0
    %1452 = vmatpush1.msra.mxu0 0.0
    %1453 = vmatprep.subr.mxu0 0.0
    %1454 = vmatpush1.msra.mxu0 0.0
    %1455 = vmatprep.subr.mxu0 0.0
    %1456 = vmatpush1.msra.mxu0 0.0
    %1457 = vmatprep.subr.mxu0 0.0
    %1458 = vmatpush1.msra.mxu0 0.0
    %1459 = vmatprep.subr.mxu0 0.0
    %1460 = vmatpush1.msra.mxu0 0.0
    %1461 = vmatprep.subr.mxu0 0.0
    %1462 = vmatpush1.msra.mxu0 0.0
    %1463 = vmatprep.subr.mxu0 0.0
    %1464 = vmatpush1.msra.mxu0 0.0
    %1465 = vmatprep.subr.mxu0 0.0
    %1466 = vmatpush1.msra.mxu0 0.0
    %1467 = vmatprep.subr.mxu0 0.0
    %1468 = vmatpush1.msra.mxu0 0.0
    %1469 = vmatprep.subr.mxu0 0.0
    %1470 = vmatpush1.msra.mxu0 0.0
    %1471 = vmatprep.subr.mxu0 0.0
    %1472 = vmatpush1.msra.mxu0 0.0
    %1473 = vmatprep.subr.mxu0 0.0
    %1474 = vmatpush1.msra.mxu0 0.0
    %1475 = vmatprep.subr.mxu0 0.0
    %1476 = vmatpush1.msra.mxu0 0.0
    %1477 = vmatprep.subr.mxu0 0.0
    %1478 = vmatpush1.msra.mxu0 0.0
    %1479 = vmatprep.subr.mxu0 0.0
    %1480 = vmatpush1.msra.mxu0 0.0
    %1481 = vmatprep.subr.mxu0 0.0
    %1482 = vmatpush1.msra.mxu0 0.0
    %1483 = vmatprep.subr.mxu0 0.0
    %1484 = vmatpush1.msra.mxu0 0.0
    %1485 = vmatprep.subr.mxu0 0.0
    %1486 = vmatpush1.msra.mxu0 0.0
    %1487 = vmatprep.subr.mxu0 0.0
    %1488 = vmatpush1.msra.mxu0 0.0
    %1489 = vmatprep.subr.mxu0 0.0
    %1490 = vmatpush1.msra.mxu0 0.0
    %1491 = vmatprep.subr.mxu0 0.0
    %1492 = vmatpush1.msra.mxu0 0.0
    %1493 = vmatprep.mubr.f32.mxu0 0.0
    %v1494 = vand.u32 %v1147, 4294901760
    %v1495 = vsub.f32 %v1147, %v1494
    %v1496 = vand.u32 %v1495, 4294901760
    %1497 = vmatmul.mubr.f32.gmra.mrb[0].mxu0 %v1496
    %v1498 = vpop.f32.mrb[0].mxu0
    %v1499 = vadd.f32 %v1415, %v1498
    %v1500 = vpop.f32.mrb[0].mxu0
    %1501 = vmatprep.mubr.f32.mxu0 0.0
    %v1502 = vand.u32 %v1150, 4294901760
    %v1503 = vsub.f32 %v1150, %v1502
    %v1504 = vand.u32 %v1503, 4294901760
    %1505 = vmatmul.mubr.f32.gmra.mrb[0].mxu0 %v1504
    %v1506 = vpop.f32.mrb[0].mxu0
    %v1507 = vadd.f32 %v1422, %v1506
    %v1508 = vpop.f32.mrb[0].mxu0
    %1509 = vdwg.mxu0
    %1510 = vmatprep.subr.mxu0 0.0
    %v1511 = vand.u32 %v1131, 4294901760
    %v1512 = vsub.f32 %v1131, %v1511
    %v1513 = vand.u32 %v1512, 4294901760
    %1514 = vmatpush1.msra.mxu0 %v1513
    %1515 = vmatprep.subr.mxu0 0.0
    %v1516 = vand.u32 %v1133, 4294901760
    %v1517 = vsub.f32 %v1133, %v1516
    %v1518 = vand.u32 %v1517, 4294901760
    %1519 = vmatpush1.msra.mxu0 %v1518
    %1520 = vmatprep.subr.mxu0 0.0
    %v1521 = vand.u32 %v1135, 4294901760
    %v1522 = vsub.f32 %v1135, %v1521
    %v1523 = vand.u32 %v1522, 4294901760
    %1524 = vmatpush1.msra.mxu0 %v1523
    %1525 = vmatprep.subr.mxu0 0.0
    %v1526 = vand.u32 %v1137, 4294901760
    %v1527 = vsub.f32 %v1137, %v1526
    %v1528 = vand.u32 %v1527, 4294901760
    %1529 = vmatpush1.msra.mxu0 %v1528
    %1530 = vmatprep.subr.mxu0 0.0
    %1531 = vmatpush1.msra.mxu0 0.0
    %1532 = vmatprep.subr.mxu0 0.0
    %1533 = vmatpush1.msra.mxu0 0.0
    %1534 = vmatprep.subr.mxu0 0.0
    %1535 = vmatpush1.msra.mxu0 0.0
    %1536 = vmatprep.subr.mxu0 0.0
    %1537 = vmatpush1.msra.mxu0 0.0
    %1538 = vmatprep.subr.mxu0 0.0
    %1539 = vmatpush1.msra.mxu0 0.0
    %1540 = vmatprep.subr.mxu0 0.0
    %1541 = vmatpush1.msra.mxu0 0.0
    %1542 = vmatprep.subr.mxu0 0.0
    %1543 = vmatpush1.msra.mxu0 0.0
    %1544 = vmatprep.subr.mxu0 0.0
    %1545 = vmatpush1.msra.mxu0 0.0
    %1546 = vmatprep.subr.mxu0 0.0
    %1547 = vmatpush1.msra.mxu0 0.0
    %1548 = vmatprep.subr.mxu0 0.0
    %1549 = vmatpush1.msra.mxu0 0.0
    %1550 = vmatprep.subr.mxu0 0.0
    %1551 = vmatpush1.msra.mxu0 0.0
    %1552 = vmatprep.subr.mxu0 0.0
    %1553 = vmatpush1.msra.mxu0 0.0
    %1554 = vmatprep.subr.mxu0 0.0
    %1555 = vmatpush1.msra.mxu0 0.0
    %1556 = vmatprep.subr.mxu0 0.0
    %1557 = vmatpush1.msra.mxu0 0.0
    %1558 = vmatprep.subr.mxu0 0.0
    %1559 = vmatpush1.msra.mxu0 0.0
    %1560 = vmatprep.subr.mxu0 0.0
    %1561 = vmatpush1.msra.mxu0 0.0
    %1562 = vmatprep.subr.mxu0 0.0
    %1563 = vmatpush1.msra.mxu0 0.0
    %1564 = vmatprep.subr.mxu0 0.0
    %1565 = vmatpush1.msra.mxu0 0.0
    %1566 = vmatprep.subr.mxu0 0.0
    %1567 = vmatpush1.msra.mxu0 0.0
    %1568 = vmatprep.subr.mxu0 0.0
    %1569 = vmatpush1.msra.mxu0 0.0
    %1570 = vmatprep.subr.mxu0 0.0
    %1571 = vmatpush1.msra.mxu0 0.0
    %1572 = vmatprep.subr.mxu0 0.0
    %1573 = vmatpush1.msra.mxu0 0.0
    %1574 = vmatprep.subr.mxu0 0.0
    %1575 = vmatpush1.msra.mxu0 0.0
    %1576 = vmatprep.subr.mxu0 0.0
    %1577 = vmatpush1.msra.mxu0 0.0
    %1578 = vmatprep.subr.mxu0 0.0
    %1579 = vmatpush1.msra.mxu0 0.0
    %1580 = vmatprep.subr.mxu0 0.0
    %1581 = vmatpush1.msra.mxu0 0.0
    %1582 = vmatprep.subr.mxu0 0.0
    %1583 = vmatpush1.msra.mxu0 0.0
    %1584 = vmatprep.subr.mxu0 0.0
    %1585 = vmatpush1.msra.mxu0 0.0
    %1586 = vmatprep.mubr.f32.mxu0 0.0
    %v1587 = vand.u32 %v1147, 4294901760
    %1588 = vmatmul.mubr.f32.gmra.mrb[0].mxu0 %v1587
    %v1589 = vpop.f32.mrb[0].mxu0
    %v1590 = vadd.f32 %v1499, %v1589
    %v1591 = vpop.f32.mrb[0].mxu0
    %1592 = vmatprep.mubr.f32.mxu0 0.0
    %v1593 = vand.u32 %v1150, 4294901760
    %1594 = vmatmul.mubr.f32.gmra.mrb[0].mxu0 %v1593
    %v1595 = vpop.f32.mrb[0].mxu0
    %v1596 = vadd.f32 %v1507, %v1595
    %v1597 = vpop.f32.mrb[0].mxu0
    %1598 = vdwg.mxu0
    %1599 = vmatprep.subr.mxu0 0.0
    %v1600 = vand.u32 %v1131, 4294901760
    %1601 = vmatpush1.msra.mxu0 %v1600
    %1602 = vmatprep.subr.mxu0 0.0
    %v1603 = vand.u32 %v1133, 4294901760
    %1604 = vmatpush1.msra.mxu0 %v1603
    %1605 = vmatprep.subr.mxu0 0.0
    %v1606 = vand.u32 %v1135, 4294901760
    %1607 = vmatpush1.msra.mxu0 %v1606
    %1608 = vmatprep.subr.mxu0 0.0
    %v1609 = vand.u32 %v1137, 4294901760
    %1610 = vmatpush1.msra.mxu0 %v1609
    %1611 = vmatprep.subr.mxu0 0.0
    %1612 = vmatpush1.msra.mxu0 0.0
    %1613 = vmatprep.subr.mxu0 0.0
    %1614 = vmatpush1.msra.mxu0 0.0
    %1615 = vmatprep.subr.mxu0 0.0
    %1616 = vmatpush1.msra.mxu0 0.0
    %1617 = vmatprep.subr.mxu0 0.0
    %1618 = vmatpush1.msra.mxu0 0.0
    %1619 = vmatprep.subr.mxu0 0.0
    %1620 = vmatpush1.msra.mxu0 0.0
    %1621 = vmatprep.subr.mxu0 0.0
    %1622 = vmatpush1.msra.mxu0 0.0
    %1623 = vmatprep.subr.mxu0 0.0
    %1624 = vmatpush1.msra.mxu0 0.0
    %1625 = vmatprep.subr.mxu0 0.0
    %1626 = vmatpush1.msra.mxu0 0.0
    %1627 = vmatprep.subr.mxu0 0.0
    %1628 = vmatpush1.msra.mxu0 0.0
    %1629 = vmatprep.subr.mxu0 0.0
    %1630 = vmatpush1.msra.mxu0 0.0
    %1631 = vmatprep.subr.mxu0 0.0
    %1632 = vmatpush1.msra.mxu0 0.0
    %1633 = vmatprep.subr.mxu0 0.0
    %1634 = vmatpush1.msra.mxu0 0.0
    %1635 = vmatprep.subr.mxu0 0.0
    %1636 = vmatpush1.msra.mxu0 0.0
    %1637 = vmatprep.subr.mxu0 0.0
    %1638 = vmatpush1.msra.mxu0 0.0
    %1639 = vmatprep.subr.mxu0 0.0
    %1640 = vmatpush1.msra.mxu0 0.0
    %1641 = vmatprep.subr.mxu0 0.0
    %1642 = vmatpush1.msra.mxu0 0.0
    %1643 = vmatprep.subr.mxu0 0.0
    %1644 = vmatpush1.msra.mxu0 0.0
    %1645 = vmatprep.subr.mxu0 0.0
    %1646 = vmatpush1.msra.mxu0 0.0
    %1647 = vmatprep.subr.mxu0 0.0
    %1648 = vmatpush1.msra.mxu0 0.0
    %1649 = vmatprep.subr.mxu0 0.0
    %1650 = vmatpush1.msra.mxu0 0.0
    %1651 = vmatprep.subr.mxu0 0.0
    %1652 = vmatpush1.msra.mxu0 0.0
    %1653 = vmatprep.subr.mxu0 0.0
    %1654 = vmatpush1.msra.mxu0 0.0
    %1655 = vmatprep.subr.mxu0 0.0
    %1656 = vmatpush1.msra.mxu0 0.0
    %1657 = vmatprep.subr.mxu0 0.0
    %1658 = vmatpush1.msra.mxu0 0.0
    %1659 = vmatprep.subr.mxu0 0.0
    %1660 = vmatpush1.msra.mxu0 0.0
    %1661 = vmatprep.subr.mxu0 0.0
    %1662 = vmatpush1.msra.mxu0 0.0
    %1663 = vmatprep.subr.mxu0 0.0
    %1664 = vmatpush1.msra.mxu0 0.0
    %1665 = vmatprep.subr.mxu0 0.0
    %1666 = vmatpush1.msra.mxu0 0.0
    %1667 = vmatprep.mubr.f32.mxu0 0.0
    %v1668 = vand.u32 %v1147, 4294901760
    %1669 = vmatmul.mubr.f32.gmra.mrb[0].mxu0 %v1668
    %v1670 = vpop.f32.mrb[0].mxu0
    %v1671 = vadd.f32 %v1590, %v1670
    %v1672 = vpop.f32.mrb[0].mxu0
    %1673 = vmatprep.mubr.f32.mxu0 0.0
    %v1674 = vand.u32 %v1150, 4294901760
    %1675 = vmatmul.mubr.f32.gmra.mrb[0].mxu0 %v1674
    %v1676 = vpop.f32.mrb[0].mxu0
    %v1677 = vadd.f32 %v1596, %v1676
    %v1678 = vpop.f32.mrb[0].mxu0
    %1679 = vdwg.mxu0
    %vm1680 = vcmask 7168
    %1681 = vst.msk [vmem:[%s3] sm:$0xff] %vm1680, %v1671
    %1682 = vst.msk [vmem:[%s3 + $0x8] sm:$0xff] %vm1680, %v1677
    %v1683 = vsub.f32 %v1671, %v1671
    %v1684 = vsub.f32 %v1677, %v1677
    %v1685 = vmul.f32 %v1683, 1.442695
    %v1686 = vpow.pop %v1685
    %v1687 = vmul.f32 %v1684, 1.442695
    %v1688 = vpow.pop %v1687
    %v1689 = vadd.f32 %v1686, 0.0
    %v1690 = vadd.f32 %v1688, 0.0
    %v1691 = vrcp.pop %v1689
    %v1692 = vmul.f32 %v1686, %v1691
    %v1693 = vrcp.pop %v1690
    %v1694 = vmul.f32 %v1688, %v1693
    %1696 = vset.pattern.permute.xlu0 0
    %1697 = vperm.xlu0 %1696, %v1692
    %v1698 = vpop.permute.xlu0 %1697
    %1701 = vset.pattern.permute.xlu0 0
    %1702 = vperm.xlu0 %1701, %v1694
    %v1703 = vpop.permute.xlu0 %1702
    %v1705 = vmul.f32 %v1698, %v42
    %v1706 = vmul.f32 %v1703, %v43
    %v1707 = vadd.f32 %v1705, %v553
    %v1708 = vadd.f32 %v1706, %v559
    %1709 = vst.msk [vmem:[#allocation7] sm:$0xff] %vm53, %v1707
    %1710 = vst.msk [vmem:[#allocation7 + $0x8] sm:$0xff] %vm53, %v1708
    // Predicated region
    $region18: #{component_combination_forward.1} parent=1 // pred_check
      _
    $region19: #{component_combination_forward.1} parent=1 // pred_check_branch
      %1712 = sbr.rel (0) target = $region21
    $region20: #{component_combination_forward.1} parent=1 // pred_region
      %s1714 = ssub.s32 256, 256
      %1715 = vsyncadd [#allocation4], %s1714
      %s1716 = sshll.u32 [#allocation7], 4
      %s1717 = int_to_ptr.vmem [resolvable:$true] %s1716
      %1722 = dma.vmem_to_hbm [thread:$0]  %s1717, 256, %s2, [#allocation4], 128, 128, 8
    $region21: #{component_combination_forward.1} parent=1 // pred_fallthru
      _
    // Predicated region
    $region22: #{component_combination_forward.1} parent=1 // pred_check
      _
    $region23: #{component_combination_forward.1} parent=1 // pred_check_branch
      %1724 = sbr.rel (0) target = $region25
    $region24: #{component_combination_forward.1} parent=1 // pred_region
      _
    $region25: #{component_combination_forward.1} parent=1 // pred_fallthru
      _
    // Predicated region
    $region26: #{component_combination_forward.1} parent=1 // pred_check
      _
    $region27: #{component_combination_forward.1} parent=1 // pred_check_branch
      %1726 = sbr.rel (0) target = $region29
    $region28: #{component_combination_forward.1} parent=1 // pred_region
      %1727 = dma.done [#allocation4], 256
    $region29: #{component_combination_forward.1} parent=1 // pred_fallthru
      _
    // Predicated region
    $region30: #{component_combination_forward.1} parent=1 // pred_check
      _
    $region31: #{component_combination_forward.1} parent=1 // pred_check_branch
      %1729 = sbr.rel (0) target = $region33
    $region32: #{component_combination_forward.1} parent=1 // pred_region
      _
    $region33: #{component_combination_forward.1} parent=1 // pred_fallthru
      _
    %1730 = vsyncpa [#allocation3], 1
    %1731 = vsyncpa [#allocation6], 1
    %1732 = vsyncpa [#allocation4], 1

</llo_original>
